<compile_context>
chip_gen: v5e
topology: v5e:2x2
jax: 0.10.0
libtpu: 0.0.40
codegen_flags: <defaults>
</compile_context>

<pallas_src>
import functools
import math

import jax
import jax.numpy as jnp
from jax.experimental import pallas as pl
from jax.experimental.pallas import tpu as pltpu


# ----------------------------------------------------------------------------
# Kernel: one grid step == (batch block, layer).  The activation for the batch
# block lives in the y output block's VMEM buffer and is carried across layers.
# ----------------------------------------------------------------------------
def _encoder_stack_kernel(nheads, eps, S, E,
                          x_ref,
                          wqkv_ref, bqkv_ref,
                          wo_ref, bo_ref,
                          g1_ref, be1_ref,
                          w1_ref, b1_ref, w2_ref, b2_ref,
                          g2_ref, be2_ref,
                          y_ref, aw_ref,
                          ctx_ref):
    l = pl.program_id(1)
    n_layers = pl.num_programs(1)
    hd = E // nheads
    scale = 1.0 / math.sqrt(float(hd))
    bt = y_ref.shape[0]
    BS = bt * S

    # Layer 0: seed the resident activation from the kernel input (output blocks
    # are not pre-loaded from HBM even when aliased, so this copy is required).
    @pl.when(l == 0)
    def _():
        y_ref[...] = x_ref[...]

    x = y_ref[...].reshape(BS, E).astype(jnp.float32)          # (BS, E) f32
    x_bf = x.astype(jnp.bfloat16)

    # --- fused QKV projection: one wide-N matmul (bf16 MXU, f32 accumulate) ---
    qkv = jnp.dot(x_bf, wqkv_ref[0],
                  preferred_element_type=jnp.float32) + bqkv_ref[0]   # (BS, 3E)
    # Static lane slices at multiples of E (lane-aligned whenever E % 128 == 0).
    q = (qkv[:, 0:E] * scale).astype(jnp.bfloat16)
    k = qkv[:, E:2 * E].astype(jnp.bfloat16)
    v = qkv[:, 2 * E:3 * E].astype(jnp.bfloat16)

    is_last = l == n_layers - 1
    inv_h = 1.0 / float(nheads)

    # --- per-head attention.  Small static head loop; per-head context vectors
    # are written into the (BS, E) VMEM scratch so the output projection can be
    # a single full-depth (K=E) matmul afterwards.
    for h in range(nheads):
        lo = h * hd
        qh = q[:, lo:lo + hd].reshape(bt, S, hd)
        kh = k[:, lo:lo + hd].reshape(bt, S, hd)
        vh = v[:, lo:lo + hd].reshape(bt, S, hd)

        s = jnp.einsum('bqd,bkd->bqk', qh, kh,
                       preferred_element_type=jnp.float32)       # (bt, S, S)
        s = s - jnp.max(s, axis=-1, keepdims=True)
        e = jnp.exp(s)
        p = e / jnp.sum(e, axis=-1, keepdims=True)               # exact softmax

        # Head-averaged attention weights are only needed for the last layer.
        @pl.when(is_last)
        def _(p=p, h=h):
            contrib = (p * inv_h).astype(aw_ref.dtype)
            if h == 0:
                aw_ref[...] = contrib
            else:
                aw_ref[...] = aw_ref[...] + contrib

        ctx = jnp.einsum('bqk,bkd->bqd', p.astype(jnp.bfloat16), vh,
                         preferred_element_type=jnp.float32)     # (bt, S, hd)
        ctx_ref[:, lo:lo + hd] = ctx.reshape(BS, hd).astype(ctx_ref.dtype)

    # --- single output projection (K = E) ---
    attn_out = jnp.dot(ctx_ref[...].astype(jnp.bfloat16), wo_ref[0],
                       preferred_element_type=jnp.float32) + bo_ref[0]

    # --- residual + LayerNorm1 (f32) ---
    h1 = x + attn_out
    mu1 = jnp.mean(h1, axis=-1, keepdims=True)
    var1 = jnp.mean((h1 - mu1) ** 2, axis=-1, keepdims=True)
    h1n = (h1 - mu1) * jax.lax.rsqrt(var1 + eps) * g1_ref[0] + be1_ref[0]

    # --- feed-forward (bf16 matmuls, f32 acc) + residual + LayerNorm2 ---
    f = jnp.dot(h1n.astype(jnp.bfloat16), w1_ref[0],
                preferred_element_type=jnp.float32) + b1_ref[0]
    f = jnp.maximum(f, 0.0)
    f = jnp.dot(f.astype(jnp.bfloat16), w2_ref[0],
                preferred_element_type=jnp.float32) + b2_ref[0]
    h2 = h1n + f
    mu2 = jnp.mean(h2, axis=-1, keepdims=True)
    var2 = jnp.mean((h2 - mu2) ** 2, axis=-1, keepdims=True)
    out = (h2 - mu2) * jax.lax.rsqrt(var2 + eps) * g2_ref[0] + be2_ref[0]

    # Carry the activation to the next layer (resident in VMEM; HBM writeback
    # happens once per batch block, after the final layer).
    y_ref[...] = out.reshape(bt, S, E).astype(y_ref.dtype)


def _layer_spec(shape):
    """Per-layer block of a (L, ...)-stacked parameter (prefetch-pipelined)."""
    n_rest = len(shape) - 1
    return pl.BlockSpec((1,) + tuple(shape[1:]),
                        lambda b, l, _n=n_rest: (l,) + (0,) * _n)


def _default_vmem_limit():
    try:
        phys = int(pltpu.get_tpu_info().vmem_capacity_bytes)
    except Exception:
        phys = 64 * 1024 * 1024          # conservative (v7x per-TC VMEM)
    return max(32 * 1024 * 1024, min(phys - (8 << 20), 100 << 20))


def encoder_forward(x, layer_params, *, nheads, eps=1e-5, batch_block=None,
                    vmem_limit_bytes=None):
    """Full encoder stack in ONE pallas_call.

    x: (B, S, E) float32.  layer_params: list of per-layer dicts.
    Returns (output, attn_weight of the last layer).
    NOTE: weights follow the x @ W convention, W shaped (in, out); real PyTorch
    checkpoints (stored (out, in)) must be transposed before being passed in.
    """
    B, S, E = x.shape
    L = len(layer_params)
    if batch_block is None:
        batch_block = B
    assert B % batch_block == 0
    nb = B // batch_block
    mm_dt = jnp.bfloat16  # MXU operand dtype for weight matrices

    def stack(name, dtype=None):
        a = jnp.stack([p[name] for p in layer_params], axis=0)
        return a.astype(dtype) if dtype is not None else a

    # Fused QKV weight / bias: (L, E, 3E) and (L, 1, 3E).
    wqkv = jnp.stack([jnp.concatenate([p["wq"], p["wk"], p["wv"]], axis=1)
                      for p in layer_params], axis=0).astype(mm_dt)
    bqkv = jnp.stack([jnp.concatenate([p["bq"], p["bk"], p["bv"]], axis=1)
                      for p in layer_params], axis=0)

    weights = [
        wqkv, bqkv,
        stack("wo", mm_dt), stack("bo"),
        stack("g1"), stack("be1"),
        stack("w1", mm_dt), stack("b1"),
        stack("w2", mm_dt), stack("b2"),
        stack("g2"), stack("be2"),
    ]

    if vmem_limit_bytes is None:
        vmem_limit_bytes = _default_vmem_limit()

    kernel = functools.partial(_encoder_stack_kernel, nheads, eps, S, E)

    act_spec = pl.BlockSpec((batch_block, S, E), lambda b, l: (b, 0, 0))
    in_specs = [act_spec] + [_layer_spec(w.shape) for w in weights]
    out_specs = (act_spec,
                 pl.BlockSpec((batch_block, S, S), lambda b, l: (b, 0, 0)))
    out_shape = (jax.ShapeDtypeStruct((B, S, E), x.dtype),
                 jax.ShapeDtypeStruct((B, S, S), jnp.float32))

    return pl.pallas_call(
        kernel,
        grid=(nb, L),
        in_specs=in_specs,
        out_specs=out_specs,
        out_shape=out_shape,
        scratch_shapes=[pltpu.VMEM((batch_block * S, E), jnp.float32)],
        input_output_aliases={0: 0},      # activation input aliases y output
        compiler_params=pltpu.CompilerParams(
            dimension_semantics=("parallel", "arbitrary"),
            vmem_limit_bytes=int(vmem_limit_bytes)),
    )(x, *weights)


# ----------------------------------------------------------------------------
# Pure-JAX f32 reference (mirrors the PyTorch Encoder forward) for validation.
# ----------------------------------------------------------------------------
def encoder_reference(x, layer_params, *, nheads, eps=1e-5):
    B, S, E = x.shape
    hd = E // nheads
    out = x
    attn_w = None
    for p in layer_params:
        q = out @ p["wq"] + p["bq"]
        k = out @ p["wk"] + p["bk"]
        v = out @ p["wv"] + p["bv"]
        q = q.reshape(B, S, nheads, hd).transpose(0, 2, 1, 3)
        k = k.reshape(B, S, nheads, hd).transpose(0, 2, 1, 3)
        v = v.reshape(B, S, nheads, hd).transpose(0, 2, 1, 3)
        s = jnp.einsum('bhqd,bhkd->bhqk', q, k) / math.sqrt(float(hd))
        pw = jax.nn.softmax(s, axis=-1)
        ctx = jnp.einsum('bhqk,bhkd->bhqd', pw, v)
        ctx = ctx.transpose(0, 2, 1, 3).reshape(B, S, E)
        attn_out = ctx @ p["wo"] + p["bo"]
        h1 = out + attn_out
        h1 = ((h1 - h1.mean(-1, keepdims=True))
              / jnp.sqrt(h1.var(-1, keepdims=True) + eps)) * p["g1"] + p["be1"]
        f = jnp.maximum(h1 @ p["w1"] + p["b1"], 0.0)
        f = f @ p["w2"] + p["b2"]
        h2 = h1 + f
        out = ((h2 - h2.mean(-1, keepdims=True))
               / jnp.sqrt(h2.var(-1, keepdims=True) + eps)) * p["g2"] + p["be2"]
        attn_w = pw.mean(axis=1)
    return out, attn_w


# ----------------------------------------------------------------------------
# Deterministic parameter construction (synthetic; no checkpoint load).
# ----------------------------------------------------------------------------
def init_layer_params(key, d_model, dim_ff):
    ks = jax.random.split(key, 8)
    s = 0.02
    return {
        "wq": s * jax.random.normal(ks[0], (d_model, d_model), jnp.float32),
        "bq": jnp.zeros((1, d_model), jnp.float32),
        "wk": s * jax.random.normal(ks[1], (d_model, d_model), jnp.float32),
        "bk": jnp.zeros((1, d_model), jnp.float32),
        "wv": s * jax.random.normal(ks[2], (d_model, d_model), jnp.float32),
        "bv": jnp.zeros((1, d_model), jnp.float32),
        "wo": s * jax.random.normal(ks[3], (d_model, d_model), jnp.float32),
        "bo": jnp.zeros((1, d_model), jnp.float32),
        "g1": jnp.ones((1, d_model), jnp.float32),
        "be1": jnp.zeros((1, d_model), jnp.float32),
        "w1": s * jax.random.normal(ks[4], (d_model, dim_ff), jnp.float32),
        "b1": s * jax.random.normal(ks[5], (1, dim_ff), jnp.float32),
        "w2": s * jax.random.normal(ks[6], (dim_ff, d_model), jnp.float32),
        "b2": s * jax.random.normal(ks[7], (1, d_model), jnp.float32),
        "g2": jnp.ones((1, d_model), jnp.float32),
        "be2": jnp.zeros((1, d_model), jnp.float32),
    }


if __name__ == "__main__":
    B, S, E, H, FF = 2, 8, 32, 4, 64
    NUM_LAYERS = 2

    key = jax.random.PRNGKey(0)
    k_x, *k_layers = jax.random.split(key, 1 + NUM_LAYERS)

    x = jax.random.normal(k_x, (B, S, E), jnp.float32)
    layer_params = [init_layer_params(k, E, FF) for k in k_layers]

    # Pure-JAX f32 reference (computed BEFORE the kernel so x is not needed
    # afterwards, e.g. if a jitted caller donates it into the aliased output).
    ref_out, ref_aw = encoder_reference(x, layer_params, nheads=H)
    ref_out = jax.block_until_ready(ref_out)

    # batch_block=1 exercises the parallel batch grid axis (v7x megacore path).
    out, attn_w = encoder_forward(x, layer_params, nheads=H, batch_block=1)
    out = jax.block_until_ready(out)
    attn_w = jax.block_until_ready(attn_w)

    assert out.shape == (B, S, E)
    assert attn_w.shape == (B, S, S)
    assert bool(jnp.all(jnp.isfinite(out)))
    assert bool(jnp.allclose(out, ref_out, atol=3e-2, rtol=3e-2))
    assert bool(jnp.allclose(attn_w, ref_aw, atol=3e-2, rtol=3e-2))
    print("KERNEL_OK")
</pallas_src>

<mosaic_0001>
module attributes {stable_mosaic.version = 11 : i64} {
  func.func @_encoder_stack_kernel(%arg0: i32, %arg1: i32, %arg2: memref<1x8x32xf32, #tpu.memory_space<vmem>>, %arg3: memref<1x32x96xbf16, #tpu.memory_space<vmem>>, %arg4: memref<1x1x96xf32, #tpu.memory_space<vmem>>, %arg5: memref<1x32x32xbf16, #tpu.memory_space<vmem>>, %arg6: memref<1x1x32xf32, #tpu.memory_space<vmem>>, %arg7: memref<1x1x32xf32, #tpu.memory_space<vmem>>, %arg8: memref<1x1x32xf32, #tpu.memory_space<vmem>>, %arg9: memref<1x32x64xbf16, #tpu.memory_space<vmem>>, %arg10: memref<1x1x64xf32, #tpu.memory_space<vmem>>, %arg11: memref<1x64x32xbf16, #tpu.memory_space<vmem>>, %arg12: memref<1x1x32xf32, #tpu.memory_space<vmem>>, %arg13: memref<1x1x32xf32, #tpu.memory_space<vmem>>, %arg14: memref<1x1x32xf32, #tpu.memory_space<vmem>>, %arg15: memref<1x8x32xf32, #tpu.memory_space<vmem>>, %arg16: memref<1x8x8xf32, #tpu.memory_space<vmem>>, %arg17: memref<8x32xf32, #tpu.memory_space<vmem>>) attributes {dimension_semantics = [#tpu.dimension_semantics<parallel>, #tpu.dimension_semantics<arbitrary>], iteration_bounds = array<i64: 2, 2>, scalar_prefetch = 0 : i64, scratch_operands = 1 : i64, tpu.core_type = #tpu.core_type<tc>, window_params = [{transform_indices = @transform_0, window_bounds = array<i64: 1, 8, 32>}, {transform_indices = @transform_1, window_bounds = array<i64: 1, 32, 96>}, {transform_indices = @transform_2, window_bounds = array<i64: 1, 1, 96>}, {transform_indices = @transform_3, window_bounds = array<i64: 1, 32, 32>}, {transform_indices = @transform_4, window_bounds = array<i64: 1, 1, 32>}, {transform_indices = @transform_5, window_bounds = array<i64: 1, 1, 32>}, {transform_indices = @transform_6, window_bounds = array<i64: 1, 1, 32>}, {transform_indices = @transform_7, window_bounds = array<i64: 1, 32, 64>}, {transform_indices = @transform_8, window_bounds = array<i64: 1, 1, 64>}, {transform_indices = @transform_9, window_bounds = array<i64: 1, 64, 32>}, {transform_indices = @transform_10, window_bounds = array<i64: 1, 1, 32>}, {transform_indices = @transform_11, window_bounds = array<i64: 1, 1, 32>}, {transform_indices = @transform_12, window_bounds = array<i64: 1, 1, 32>}, {transform_indices = @transform_13, window_bounds = array<i64: 1, 8, 32>}, {transform_indices = @transform_14, window_bounds = array<i64: 1, 8, 8>}]} {
    %c0_i32 = arith.constant 0 : i32
    %0 = arith.cmpi eq, %arg1, %c0_i32 : i32
    %1 = arith.extui %0 : i1 to i32
    %c0_i32_0 = arith.constant 0 : i32
    %2 = arith.cmpi ne, %1, %c0_i32_0 : i32
    scf.if %2 {
      %c0_84 = arith.constant 0 : index
      %c0_85 = arith.constant 0 : index
      %c0_86 = arith.constant 0 : index
      %193 = vector.load %arg2[%c0_84, %c0_85, %c0_86] : memref<1x8x32xf32, #tpu.memory_space<vmem>>, vector<1x8x32xf32>
      %c0_87 = arith.constant 0 : index
      %c0_88 = arith.constant 0 : index
      %c0_89 = arith.constant 0 : index
      %194 = vector.load %arg15[%c0_87, %c0_88, %c0_89] : memref<1x8x32xf32, #tpu.memory_space<vmem>>, vector<1x8x32xf32>
      tpu.vector_store %arg15[%c0_87, %c0_88, %c0_89], %193 {strides = array<i32>} : memref<1x8x32xf32, #tpu.memory_space<vmem>>, vector<1x8x32xf32>,
    } else {
    }
    %c0 = arith.constant 0 : index
    %c0_1 = arith.constant 0 : index
    %c0_2 = arith.constant 0 : index
    %3 = vector.load %arg15[%c0, %c0_1, %c0_2] : memref<1x8x32xf32, #tpu.memory_space<vmem>>, vector<1x8x32xf32>
    %4 = vector.shape_cast %3 : vector<1x8x32xf32> to vector<8x32xf32>
    %5 = arith.truncf %4 : vector<8x32xf32> to vector<8x32xbf16>
    %c0_3 = arith.constant 0 : index
    %c0_4 = arith.constant 0 : index
    %c0_5 = arith.constant 0 : index
    %6 = vector.load %arg3[%c0_3, %c0_4, %c0_5] : memref<1x32x96xbf16, #tpu.memory_space<vmem>>, vector<1x32x96xbf16>
    %7 = vector.shape_cast %6 : vector<1x32x96xbf16> to vector<32x96xbf16>
    %cst = arith.constant dense<0.000000e+00> : vector<8x96xf32>
    %8 = tpu.matmul %5, %7, %cst {dimension_numbers = #tpu.dot_dimension_numbers<[1], [0], [0], [1], [0, 0, 1, 1], [], []>} : vector<8x32xbf16>, vector<32x96xbf16>, vector<8x96xf32> -> vector<8x96xf32>
    %c0_6 = arith.constant 0 : index
    %c0_7 = arith.constant 0 : index
    %c0_8 = arith.constant 0 : index
    %9 = vector.load %arg4[%c0_6, %c0_7, %c0_8] : memref<1x1x96xf32, #tpu.memory_space<vmem>>, vector<1x1x96xf32>
    %10 = vector.shape_cast %9 : vector<1x1x96xf32> to vector<1x96xf32>
    %11 = vector.broadcast %10 : vector<1x96xf32> to vector<8x96xf32>
    %12 = arith.addf %8, %11 : vector<8x96xf32>
    %13 = vector.extract_strided_slice %12 {offsets = [0, 0], sizes = [8, 32], strides = [1, 1]} : vector<8x96xf32> to vector<8x32xf32>
    %cst_9 = arith.constant 0.353553385 : f32
    %14 = vector.broadcast %cst_9 : f32 to vector<8x32xf32>
    %15 = arith.mulf %13, %14 : vector<8x32xf32>
    %16 = arith.truncf %15 : vector<8x32xf32> to vector<8x32xbf16>
    %17 = vector.extract_strided_slice %12 {offsets = [0, 32], sizes = [8, 32], strides = [1, 1]} : vector<8x96xf32> to vector<8x32xf32>
    %18 = arith.truncf %17 : vector<8x32xf32> to vector<8x32xbf16>
    %19 = vector.extract_strided_slice %12 {offsets = [0, 64], sizes = [8, 32], strides = [1, 1]} : vector<8x96xf32> to vector<8x32xf32>
    %20 = arith.truncf %19 : vector<8x32xf32> to vector<8x32xbf16>
    %c1_i32 = arith.constant 1 : i32
    %21 = arith.cmpi eq, %arg1, %c1_i32 : i32
    %22 = vector.extract_strided_slice %16 {offsets = [0, 0], sizes = [8, 8], strides = [1, 1]} : vector<8x32xbf16> to vector<8x8xbf16>
    %23 = vector.shape_cast %22 : vector<8x8xbf16> to vector<1x8x8xbf16>
    %24 = vector.extract_strided_slice %18 {offsets = [0, 0], sizes = [8, 8], strides = [1, 1]} : vector<8x32xbf16> to vector<8x8xbf16>
    %25 = vector.shape_cast %24 : vector<8x8xbf16> to vector<1x8x8xbf16>
    %26 = vector.extract_strided_slice %20 {offsets = [0, 0], sizes = [8, 8], strides = [1, 1]} : vector<8x32xbf16> to vector<8x8xbf16>
    %27 = vector.shape_cast %26 : vector<8x8xbf16> to vector<1x8x8xbf16>
    "tpu.trace_start"() <{level = 10 : i32, message = "bqd,bkd->bqk"}> : () -> ()
    %cst_10 = arith.constant dense<0.000000e+00> : vector<1x8x8xf32>
    %28 = tpu.matmul %23, %25, %cst_10 {dimension_numbers = #tpu.dot_dimension_numbers<[2], [2], [1], [1], [0, 0, 0, 1, 1, 1], [0], [0]>} : vector<1x8x8xbf16>, vector<1x8x8xbf16>, vector<1x8x8xf32> -> vector<1x8x8xf32>
    "tpu.trace_stop"() : () -> ()
    %cst_11 = arith.constant dense<0xFF800000> : vector<1x8xf32>
    %29 = vector.multi_reduction <maximumf>, %28, %cst_11 [2] : vector<1x8x8xf32> to vector<1x8xf32>
    %30 = vector.shape_cast %29 : vector<1x8xf32> to vector<1x8x1xf32>
    %31 = vector.broadcast %30 : vector<1x8x1xf32> to vector<1x8x8xf32>
    %32 = arith.subf %28, %31 : vector<1x8x8xf32>
    %33 = math.exp %32 : vector<1x8x8xf32>
    %cst_12 = arith.constant dense<0.000000e+00> : vector<1x8xf32>
    %34 = vector.multi_reduction <add>, %33, %cst_12 [2] : vector<1x8x8xf32> to vector<1x8xf32>
    %35 = vector.shape_cast %34 : vector<1x8xf32> to vector<1x8x1xf32>
    %36 = vector.broadcast %35 : vector<1x8x1xf32> to vector<1x8x8xf32>
    %37 = arith.divf %33, %36 : vector<1x8x8xf32>
    %38 = arith.extui %21 : i1 to i32
    %c0_i32_13 = arith.constant 0 : i32
    %39 = arith.cmpi ne, %38, %c0_i32_13 : i32
    scf.if %39 {
      %cst_84 = arith.constant 2.500000e-01 : f32
      %193 = vector.broadcast %cst_84 : f32 to vector<1x8x8xf32>
      %194 = arith.mulf %37, %193 : vector<1x8x8xf32>
      %c0_85 = arith.constant 0 : index
      %c0_86 = arith.constant 0 : index
      %c0_87 = arith.constant 0 : index
      %195 = vector.load %arg16[%c0_85, %c0_86, %c0_87] : memref<1x8x8xf32, #tpu.memory_space<vmem>>, vector<1x8x8xf32>
      tpu.vector_store %arg16[%c0_85, %c0_86, %c0_87], %194 {strides = array<i32>} : memref<1x8x8xf32, #tpu.memory_space<vmem>>, vector<1x8x8xf32>,
    } else {
    }
    %40 = arith.truncf %37 : vector<1x8x8xf32> to vector<1x8x8xbf16>
    "tpu.trace_start"() <{level = 10 : i32, message = "bqk,bkd->bqd"}> : () -> ()
    %cst_14 = arith.constant dense<0.000000e+00> : vector<1x8x8xf32>
    %41 = tpu.matmul %40, %27, %cst_14 {dimension_numbers = #tpu.dot_dimension_numbers<[2], [1], [1], [2], [0, 0, 0, 1, 1, 2], [0], [0]>} : vector<1x8x8xbf16>, vector<1x8x8xbf16>, vector<1x8x8xf32> -> vector<1x8x8xf32>
    "tpu.trace_stop"() : () -> ()
    %42 = vector.shape_cast %41 : vector<1x8x8xf32> to vector<8x8xf32>
    %c0_15 = arith.constant 0 : index
    %c0_16 = arith.constant 0 : index
    %43 = vector.load %arg17[%c0_15, %c0_16] : memref<8x32xf32, #tpu.memory_space<vmem>>, vector<8x8xf32>
    tpu.vector_store %arg17[%c0_15, %c0_16], %42 {strides = array<i32>} : memref<8x32xf32, #tpu.memory_space<vmem>>, vector<8x8xf32>,
    %44 = vector.extract_strided_slice %16 {offsets = [0, 8], sizes = [8, 8], strides = [1, 1]} : vector<8x32xbf16> to vector<8x8xbf16>
    %45 = vector.shape_cast %44 : vector<8x8xbf16> to vector<1x8x8xbf16>
    %46 = vector.extract_strided_slice %18 {offsets = [0, 8], sizes = [8, 8], strides = [1, 1]} : vector<8x32xbf16> to vector<8x8xbf16>
    %47 = vector.shape_cast %46 : vector<8x8xbf16> to vector<1x8x8xbf16>
    %48 = vector.extract_strided_slice %20 {offsets = [0, 8], sizes = [8, 8], strides = [1, 1]} : vector<8x32xbf16> to vector<8x8xbf16>
    %49 = vector.shape_cast %48 : vector<8x8xbf16> to vector<1x8x8xbf16>
    "tpu.trace_start"() <{level = 10 : i32, message = "bqd,bkd->bqk"}> : () -> ()
    %cst_17 = arith.constant dense<0.000000e+00> : vector<1x8x8xf32>
    %50 = tpu.matmul %45, %47, %cst_17 {dimension_numbers = #tpu.dot_dimension_numbers<[2], [2], [1], [1], [0, 0, 0, 1, 1, 1], [0], [0]>} : vector<1x8x8xbf16>, vector<1x8x8xbf16>, vector<1x8x8xf32> -> vector<1x8x8xf32>
    "tpu.trace_stop"() : () -> ()
    %cst_18 = arith.constant dense<0xFF800000> : vector<1x8xf32>
    %51 = vector.multi_reduction <maximumf>, %50, %cst_18 [2] : vector<1x8x8xf32> to vector<1x8xf32>
    %52 = vector.shape_cast %51 : vector<1x8xf32> to vector<1x8x1xf32>
    %53 = vector.broadcast %52 : vector<1x8x1xf32> to vector<1x8x8xf32>
    %54 = arith.subf %50, %53 : vector<1x8x8xf32>
    %55 = math.exp %54 : vector<1x8x8xf32>
    %cst_19 = arith.constant dense<0.000000e+00> : vector<1x8xf32>
    %56 = vector.multi_reduction <add>, %55, %cst_19 [2] : vector<1x8x8xf32> to vector<1x8xf32>
    %57 = vector.shape_cast %56 : vector<1x8xf32> to vector<1x8x1xf32>
    %58 = vector.broadcast %57 : vector<1x8x1xf32> to vector<1x8x8xf32>
    %59 = arith.divf %55, %58 : vector<1x8x8xf32>
    %60 = arith.extui %21 : i1 to i32
    %c0_i32_20 = arith.constant 0 : i32
    %61 = arith.cmpi ne, %60, %c0_i32_20 : i32
    scf.if %61 {
      %cst_84 = arith.constant 2.500000e-01 : f32
      %193 = vector.broadcast %cst_84 : f32 to vector<1x8x8xf32>
      %194 = arith.mulf %59, %193 : vector<1x8x8xf32>
      %c0_85 = arith.constant 0 : index
      %c0_86 = arith.constant 0 : index
      %c0_87 = arith.constant 0 : index
      %195 = vector.load %arg16[%c0_85, %c0_86, %c0_87] : memref<1x8x8xf32, #tpu.memory_space<vmem>>, vector<1x8x8xf32>
      %196 = arith.addf %195, %194 : vector<1x8x8xf32>
      %c0_88 = arith.constant 0 : index
      %c0_89 = arith.constant 0 : index
      %c0_90 = arith.constant 0 : index
      %197 = vector.load %arg16[%c0_88, %c0_89, %c0_90] : memref<1x8x8xf32, #tpu.memory_space<vmem>>, vector<1x8x8xf32>
      tpu.vector_store %arg16[%c0_88, %c0_89, %c0_90], %196 {strides = array<i32>} : memref<1x8x8xf32, #tpu.memory_space<vmem>>, vector<1x8x8xf32>,
    } else {
    }
    %62 = arith.truncf %59 : vector<1x8x8xf32> to vector<1x8x8xbf16>
    "tpu.trace_start"() <{level = 10 : i32, message = "bqk,bkd->bqd"}> : () -> ()
    %cst_21 = arith.constant dense<0.000000e+00> : vector<1x8x8xf32>
    %63 = tpu.matmul %62, %49, %cst_21 {dimension_numbers = #tpu.dot_dimension_numbers<[2], [1], [1], [2], [0, 0, 0, 1, 1, 2], [0], [0]>} : vector<1x8x8xbf16>, vector<1x8x8xbf16>, vector<1x8x8xf32> -> vector<1x8x8xf32>
    "tpu.trace_stop"() : () -> ()
    %64 = vector.shape_cast %63 : vector<1x8x8xf32> to vector<8x8xf32>
    %c0_22 = arith.constant 0 : index
    %c8 = arith.constant 8 : index
    %65 = vector.load %arg17[%c0_22, %c8] : memref<8x32xf32, #tpu.memory_space<vmem>>, vector<8x8xf32>
    tpu.vector_store %arg17[%c0_22, %c8], %64 {strides = array<i32>} : memref<8x32xf32, #tpu.memory_space<vmem>>, vector<8x8xf32>,
    %66 = vector.extract_strided_slice %16 {offsets = [0, 16], sizes = [8, 8], strides = [1, 1]} : vector<8x32xbf16> to vector<8x8xbf16>
    %67 = vector.shape_cast %66 : vector<8x8xbf16> to vector<1x8x8xbf16>
    %68 = vector.extract_strided_slice %18 {offsets = [0, 16], sizes = [8, 8], strides = [1, 1]} : vector<8x32xbf16> to vector<8x8xbf16>
    %69 = vector.shape_cast %68 : vector<8x8xbf16> to vector<1x8x8xbf16>
    %70 = vector.extract_strided_slice %20 {offsets = [0, 16], sizes = [8, 8], strides = [1, 1]} : vector<8x32xbf16> to vector<8x8xbf16>
    %71 = vector.shape_cast %70 : vector<8x8xbf16> to vector<1x8x8xbf16>
    "tpu.trace_start"() <{level = 10 : i32, message = "bqd,bkd->bqk"}> : () -> ()
    %cst_23 = arith.constant dense<0.000000e+00> : vector<1x8x8xf32>
    %72 = tpu.matmul %67, %69, %cst_23 {dimension_numbers = #tpu.dot_dimension_numbers<[2], [2], [1], [1], [0, 0, 0, 1, 1, 1], [0], [0]>} : vector<1x8x8xbf16>, vector<1x8x8xbf16>, vector<1x8x8xf32> -> vector<1x8x8xf32>
    "tpu.trace_stop"() : () -> ()
    %cst_24 = arith.constant dense<0xFF800000> : vector<1x8xf32>
    %73 = vector.multi_reduction <maximumf>, %72, %cst_24 [2] : vector<1x8x8xf32> to vector<1x8xf32>
    %74 = vector.shape_cast %73 : vector<1x8xf32> to vector<1x8x1xf32>
    %75 = vector.broadcast %74 : vector<1x8x1xf32> to vector<1x8x8xf32>
    %76 = arith.subf %72, %75 : vector<1x8x8xf32>
    %77 = math.exp %76 : vector<1x8x8xf32>
    %cst_25 = arith.constant dense<0.000000e+00> : vector<1x8xf32>
    %78 = vector.multi_reduction <add>, %77, %cst_25 [2] : vector<1x8x8xf32> to vector<1x8xf32>
    %79 = vector.shape_cast %78 : vector<1x8xf32> to vector<1x8x1xf32>
    %80 = vector.broadcast %79 : vector<1x8x1xf32> to vector<1x8x8xf32>
    %81 = arith.divf %77, %80 : vector<1x8x8xf32>
    %82 = arith.extui %21 : i1 to i32
    %c0_i32_26 = arith.constant 0 : i32
    %83 = arith.cmpi ne, %82, %c0_i32_26 : i32
    scf.if %83 {
      %cst_84 = arith.constant 2.500000e-01 : f32
      %193 = vector.broadcast %cst_84 : f32 to vector<1x8x8xf32>
      %194 = arith.mulf %81, %193 : vector<1x8x8xf32>
      %c0_85 = arith.constant 0 : index
      %c0_86 = arith.constant 0 : index
      %c0_87 = arith.constant 0 : index
      %195 = vector.load %arg16[%c0_85, %c0_86, %c0_87] : memref<1x8x8xf32, #tpu.memory_space<vmem>>, vector<1x8x8xf32>
      %196 = arith.addf %195, %194 : vector<1x8x8xf32>
      %c0_88 = arith.constant 0 : index
      %c0_89 = arith.constant 0 : index
      %c0_90 = arith.constant 0 : index
      %197 = vector.load %arg16[%c0_88, %c0_89, %c0_90] : memref<1x8x8xf32, #tpu.memory_space<vmem>>, vector<1x8x8xf32>
      tpu.vector_store %arg16[%c0_88, %c0_89, %c0_90], %196 {strides = array<i32>} : memref<1x8x8xf32, #tpu.memory_space<vmem>>, vector<1x8x8xf32>,
    } else {
    }
    %84 = arith.truncf %81 : vector<1x8x8xf32> to vector<1x8x8xbf16>
    "tpu.trace_start"() <{level = 10 : i32, message = "bqk,bkd->bqd"}> : () -> ()
    %cst_27 = arith.constant dense<0.000000e+00> : vector<1x8x8xf32>
    %85 = tpu.matmul %84, %71, %cst_27 {dimension_numbers = #tpu.dot_dimension_numbers<[2], [1], [1], [2], [0, 0, 0, 1, 1, 2], [0], [0]>} : vector<1x8x8xbf16>, vector<1x8x8xbf16>, vector<1x8x8xf32> -> vector<1x8x8xf32>
    "tpu.trace_stop"() : () -> ()
    %86 = vector.shape_cast %85 : vector<1x8x8xf32> to vector<8x8xf32>
    %c0_28 = arith.constant 0 : index
    %c16 = arith.constant 16 : index
    %87 = vector.load %arg17[%c0_28, %c16] : memref<8x32xf32, #tpu.memory_space<vmem>>, vector<8x8xf32>
    tpu.vector_store %arg17[%c0_28, %c16], %86 {strides = array<i32>} : memref<8x32xf32, #tpu.memory_space<vmem>>, vector<8x8xf32>,
    %88 = vector.extract_strided_slice %16 {offsets = [0, 24], sizes = [8, 8], strides = [1, 1]} : vector<8x32xbf16> to vector<8x8xbf16>
    %89 = vector.shape_cast %88 : vector<8x8xbf16> to vector<1x8x8xbf16>
    %90 = vector.extract_strided_slice %18 {offsets = [0, 24], sizes = [8, 8], strides = [1, 1]} : vector<8x32xbf16> to vector<8x8xbf16>
    %91 = vector.shape_cast %90 : vector<8x8xbf16> to vector<1x8x8xbf16>
    %92 = vector.extract_strided_slice %20 {offsets = [0, 24], sizes = [8, 8], strides = [1, 1]} : vector<8x32xbf16> to vector<8x8xbf16>
    %93 = vector.shape_cast %92 : vector<8x8xbf16> to vector<1x8x8xbf16>
    "tpu.trace_start"() <{level = 10 : i32, message = "bqd,bkd->bqk"}> : () -> ()
    %cst_29 = arith.constant dense<0.000000e+00> : vector<1x8x8xf32>
    %94 = tpu.matmul %89, %91, %cst_29 {dimension_numbers = #tpu.dot_dimension_numbers<[2], [2], [1], [1], [0, 0, 0, 1, 1, 1], [0], [0]>} : vector<1x8x8xbf16>, vector<1x8x8xbf16>, vector<1x8x8xf32> -> vector<1x8x8xf32>
    "tpu.trace_stop"() : () -> ()
    %cst_30 = arith.constant dense<0xFF800000> : vector<1x8xf32>
    %95 = vector.multi_reduction <maximumf>, %94, %cst_30 [2] : vector<1x8x8xf32> to vector<1x8xf32>
    %96 = vector.shape_cast %95 : vector<1x8xf32> to vector<1x8x1xf32>
    %97 = vector.broadcast %96 : vector<1x8x1xf32> to vector<1x8x8xf32>
    %98 = arith.subf %94, %97 : vector<1x8x8xf32>
    %99 = math.exp %98 : vector<1x8x8xf32>
    %cst_31 = arith.constant dense<0.000000e+00> : vector<1x8xf32>
    %100 = vector.multi_reduction <add>, %99, %cst_31 [2] : vector<1x8x8xf32> to vector<1x8xf32>
    %101 = vector.shape_cast %100 : vector<1x8xf32> to vector<1x8x1xf32>
    %102 = vector.broadcast %101 : vector<1x8x1xf32> to vector<1x8x8xf32>
    %103 = arith.divf %99, %102 : vector<1x8x8xf32>
    %104 = arith.extui %21 : i1 to i32
    %c0_i32_32 = arith.constant 0 : i32
    %105 = arith.cmpi ne, %104, %c0_i32_32 : i32
    scf.if %105 {
      %cst_84 = arith.constant 2.500000e-01 : f32
      %193 = vector.broadcast %cst_84 : f32 to vector<1x8x8xf32>
      %194 = arith.mulf %103, %193 : vector<1x8x8xf32>
      %c0_85 = arith.constant 0 : index
      %c0_86 = arith.constant 0 : index
      %c0_87 = arith.constant 0 : index
      %195 = vector.load %arg16[%c0_85, %c0_86, %c0_87] : memref<1x8x8xf32, #tpu.memory_space<vmem>>, vector<1x8x8xf32>
      %196 = arith.addf %195, %194 : vector<1x8x8xf32>
      %c0_88 = arith.constant 0 : index
      %c0_89 = arith.constant 0 : index
      %c0_90 = arith.constant 0 : index
      %197 = vector.load %arg16[%c0_88, %c0_89, %c0_90] : memref<1x8x8xf32, #tpu.memory_space<vmem>>, vector<1x8x8xf32>
      tpu.vector_store %arg16[%c0_88, %c0_89, %c0_90], %196 {strides = array<i32>} : memref<1x8x8xf32, #tpu.memory_space<vmem>>, vector<1x8x8xf32>,
    } else {
    }
    %106 = arith.truncf %103 : vector<1x8x8xf32> to vector<1x8x8xbf16>
    "tpu.trace_start"() <{level = 10 : i32, message = "bqk,bkd->bqd"}> : () -> ()
    %cst_33 = arith.constant dense<0.000000e+00> : vector<1x8x8xf32>
    %107 = tpu.matmul %106, %93, %cst_33 {dimension_numbers = #tpu.dot_dimension_numbers<[2], [1], [1], [2], [0, 0, 0, 1, 1, 2], [0], [0]>} : vector<1x8x8xbf16>, vector<1x8x8xbf16>, vector<1x8x8xf32> -> vector<1x8x8xf32>
    "tpu.trace_stop"() : () -> ()
    %108 = vector.shape_cast %107 : vector<1x8x8xf32> to vector<8x8xf32>
    %c0_34 = arith.constant 0 : index
    %c24 = arith.constant 24 : index
    %109 = vector.load %arg17[%c0_34, %c24] : memref<8x32xf32, #tpu.memory_space<vmem>>, vector<8x8xf32>
    tpu.vector_store %arg17[%c0_34, %c24], %108 {strides = array<i32>} : memref<8x32xf32, #tpu.memory_space<vmem>>, vector<8x8xf32>,
    %c0_35 = arith.constant 0 : index
    %c0_36 = arith.constant 0 : index
    %110 = vector.load %arg17[%c0_35, %c0_36] : memref<8x32xf32, #tpu.memory_space<vmem>>, vector<8x32xf32>
    %111 = arith.truncf %110 : vector<8x32xf32> to vector<8x32xbf16>
    %c0_37 = arith.constant 0 : index
    %c0_38 = arith.constant 0 : index
    %c0_39 = arith.constant 0 : index
    %112 = vector.load %arg5[%c0_37, %c0_38, %c0_39] : memref<1x32x32xbf16, #tpu.memory_space<vmem>>, vector<1x32x32xbf16>
    %113 = vector.shape_cast %112 : vector<1x32x32xbf16> to vector<32x32xbf16>
    %cst_40 = arith.constant dense<0.000000e+00> : vector<8x32xf32>
    %114 = tpu.matmul %111, %113, %cst_40 {dimension_numbers = #tpu.dot_dimension_numbers<[1], [0], [0], [1], [0, 0, 1, 1], [], []>} : vector<8x32xbf16>, vector<32x32xbf16>, vector<8x32xf32> -> vector<8x32xf32>
    %c0_41 = arith.constant 0 : index
    %c0_42 = arith.constant 0 : index
    %c0_43 = arith.constant 0 : index
    %115 = vector.load %arg6[%c0_41, %c0_42, %c0_43] : memref<1x1x32xf32, #tpu.memory_space<vmem>>, vector<1x1x32xf32>
    %116 = vector.shape_cast %115 : vector<1x1x32xf32> to vector<1x32xf32>
    %117 = vector.broadcast %116 : vector<1x32xf32> to vector<8x32xf32>
    %118 = arith.addf %114, %117 : vector<8x32xf32>
    %119 = arith.addf %4, %118 : vector<8x32xf32>
    %cst_44 = arith.constant dense<0.000000e+00> : vector<8xf32>
    %120 = vector.multi_reduction <add>, %119, %cst_44 [1] : vector<8x32xf32> to vector<8xf32>
    %121 = vector.shape_cast %120 : vector<8xf32> to vector<8x1xf32>
    %cst_45 = arith.constant 3.200000e+01 : f32
    %122 = vector.broadcast %cst_45 : f32 to vector<8x1xf32>
    %123 = arith.divf %121, %122 : vector<8x1xf32>
    %124 = vector.broadcast %123 : vector<8x1xf32> to vector<8x32xf32>
    %125 = arith.subf %119, %124 : vector<8x32xf32>
    %126 = arith.mulf %125, %125 : vector<8x32xf32>
    %cst_46 = arith.constant dense<0.000000e+00> : vector<8xf32>
    %127 = vector.multi_reduction <add>, %126, %cst_46 [1] : vector<8x32xf32> to vector<8xf32>
    %128 = vector.shape_cast %127 : vector<8xf32> to vector<8x1xf32>
    %cst_47 = arith.constant 3.200000e+01 : f32
    %129 = vector.broadcast %cst_47 : f32 to vector<8x1xf32>
    %130 = arith.divf %128, %129 : vector<8x1xf32>
    %131 = vector.broadcast %123 : vector<8x1xf32> to vector<8x32xf32>
    %132 = arith.subf %119, %131 : vector<8x32xf32>
    %cst_48 = arith.constant 9.99999974E-6 : f32
    %133 = vector.broadcast %cst_48 : f32 to vector<8x1xf32>
    %134 = arith.addf %130, %133 : vector<8x1xf32>
    %135 = math.rsqrt %134 : vector<8x1xf32>
    %136 = vector.broadcast %135 : vector<8x1xf32> to vector<8x32xf32>
    %137 = arith.mulf %132, %136 : vector<8x32xf32>
    %c0_49 = arith.constant 0 : index
    %c0_50 = arith.constant 0 : index
    %c0_51 = arith.constant 0 : index
    %138 = vector.load %arg7[%c0_49, %c0_50, %c0_51] : memref<1x1x32xf32, #tpu.memory_space<vmem>>, vector<1x1x32xf32>
    %139 = vector.shape_cast %138 : vector<1x1x32xf32> to vector<1x32xf32>
    %140 = vector.broadcast %139 : vector<1x32xf32> to vector<8x32xf32>
    %141 = arith.mulf %137, %140 : vector<8x32xf32>
    %c0_52 = arith.constant 0 : index
    %c0_53 = arith.constant 0 : index
    %c0_54 = arith.constant 0 : index
    %142 = vector.load %arg8[%c0_52, %c0_53, %c0_54] : memref<1x1x32xf32, #tpu.memory_space<vmem>>, vector<1x1x32xf32>
    %143 = vector.shape_cast %142 : vector<1x1x32xf32> to vector<1x32xf32>
    %144 = vector.broadcast %143 : vector<1x32xf32> to vector<8x32xf32>
    %145 = arith.addf %141, %144 : vector<8x32xf32>
    %146 = arith.truncf %145 : vector<8x32xf32> to vector<8x32xbf16>
    %c0_55 = arith.constant 0 : index
    %c0_56 = arith.constant 0 : index
    %c0_57 = arith.constant 0 : index
    %147 = vector.load %arg9[%c0_55, %c0_56, %c0_57] : memref<1x32x64xbf16, #tpu.memory_space<vmem>>, vector<1x32x64xbf16>
    %148 = vector.shape_cast %147 : vector<1x32x64xbf16> to vector<32x64xbf16>
    %cst_58 = arith.constant dense<0.000000e+00> : vector<8x64xf32>
    %149 = tpu.matmul %146, %148, %cst_58 {dimension_numbers = #tpu.dot_dimension_numbers<[1], [0], [0], [1], [0, 0, 1, 1], [], []>} : vector<8x32xbf16>, vector<32x64xbf16>, vector<8x64xf32> -> vector<8x64xf32>
    %c0_59 = arith.constant 0 : index
    %c0_60 = arith.constant 0 : index
    %c0_61 = arith.constant 0 : index
    %150 = vector.load %arg10[%c0_59, %c0_60, %c0_61] : memref<1x1x64xf32, #tpu.memory_space<vmem>>, vector<1x1x64xf32>
    %151 = vector.shape_cast %150 : vector<1x1x64xf32> to vector<1x64xf32>
    %152 = vector.broadcast %151 : vector<1x64xf32> to vector<8x64xf32>
    %153 = arith.addf %149, %152 : vector<8x64xf32>
    %cst_62 = arith.constant 0.000000e+00 : f32
    %154 = vector.broadcast %cst_62 : f32 to vector<8x64xf32>
    %155 = arith.maximumf %153, %154 : vector<8x64xf32>
    %156 = arith.truncf %155 : vector<8x64xf32> to vector<8x64xbf16>
    %c0_63 = arith.constant 0 : index
    %c0_64 = arith.constant 0 : index
    %c0_65 = arith.constant 0 : index
    %157 = vector.load %arg11[%c0_63, %c0_64, %c0_65] : memref<1x64x32xbf16, #tpu.memory_space<vmem>>, vector<1x64x32xbf16>
    %158 = vector.shape_cast %157 : vector<1x64x32xbf16> to vector<64x32xbf16>
    %cst_66 = arith.constant dense<0.000000e+00> : vector<8x32xf32>
    %159 = tpu.matmul %156, %158, %cst_66 {dimension_numbers = #tpu.dot_dimension_numbers<[1], [0], [0], [1], [0, 0, 1, 1], [], []>} : vector<8x64xbf16>, vector<64x32xbf16>, vector<8x32xf32> -> vector<8x32xf32>
    %c0_67 = arith.constant 0 : index
    %c0_68 = arith.constant 0 : index
    %c0_69 = arith.constant 0 : index
    %160 = vector.load %arg12[%c0_67, %c0_68, %c0_69] : memref<1x1x32xf32, #tpu.memory_space<vmem>>, vector<1x1x32xf32>
    %161 = vector.shape_cast %160 : vector<1x1x32xf32> to vector<1x32xf32>
    %162 = vector.broadcast %161 : vector<1x32xf32> to vector<8x32xf32>
    %163 = arith.addf %159, %162 : vector<8x32xf32>
    %164 = arith.addf %145, %163 : vector<8x32xf32>
    %cst_70 = arith.constant dense<0.000000e+00> : vector<8xf32>
    %165 = vector.multi_reduction <add>, %164, %cst_70 [1] : vector<8x32xf32> to vector<8xf32>
    %166 = vector.shape_cast %165 : vector<8xf32> to vector<8x1xf32>
    %cst_71 = arith.constant 3.200000e+01 : f32
    %167 = vector.broadcast %cst_71 : f32 to vector<8x1xf32>
    %168 = arith.divf %166, %167 : vector<8x1xf32>
    %169 = vector.broadcast %168 : vector<8x1xf32> to vector<8x32xf32>
    %170 = arith.subf %164, %169 : vector<8x32xf32>
    %171 = arith.mulf %170, %170 : vector<8x32xf32>
    %cst_72 = arith.constant dense<0.000000e+00> : vector<8xf32>
    %172 = vector.multi_reduction <add>, %171, %cst_72 [1] : vector<8x32xf32> to vector<8xf32>
    %173 = vector.shape_cast %172 : vector<8xf32> to vector<8x1xf32>
    %cst_73 = arith.constant 3.200000e+01 : f32
    %174 = vector.broadcast %cst_73 : f32 to vector<8x1xf32>
    %175 = arith.divf %173, %174 : vector<8x1xf32>
    %176 = vector.broadcast %168 : vector<8x1xf32> to vector<8x32xf32>
    %177 = arith.subf %164, %176 : vector<8x32xf32>
    %cst_74 = arith.constant 9.99999974E-6 : f32
    %178 = vector.broadcast %cst_74 : f32 to vector<8x1xf32>
    %179 = arith.addf %175, %178 : vector<8x1xf32>
    %180 = math.rsqrt %179 : vector<8x1xf32>
    %181 = vector.broadcast %180 : vector<8x1xf32> to vector<8x32xf32>
    %182 = arith.mulf %177, %181 : vector<8x32xf32>
    %c0_75 = arith.constant 0 : index
    %c0_76 = arith.constant 0 : index
    %c0_77 = arith.constant 0 : index
    %183 = vector.load %arg13[%c0_75, %c0_76, %c0_77] : memref<1x1x32xf32, #tpu.memory_space<vmem>>, vector<1x1x32xf32>
    %184 = vector.shape_cast %183 : vector<1x1x32xf32> to vector<1x32xf32>
    %185 = vector.broadcast %184 : vector<1x32xf32> to vector<8x32xf32>
    %186 = arith.mulf %182, %185 : vector<8x32xf32>
    %c0_78 = arith.constant 0 : index
    %c0_79 = arith.constant 0 : index
    %c0_80 = arith.constant 0 : index
    %187 = vector.load %arg14[%c0_78, %c0_79, %c0_80] : memref<1x1x32xf32, #tpu.memory_space<vmem>>, vector<1x1x32xf32>
    %188 = vector.shape_cast %187 : vector<1x1x32xf32> to vector<1x32xf32>
    %189 = vector.broadcast %188 : vector<1x32xf32> to vector<8x32xf32>
    %190 = arith.addf %186, %189 : vector<8x32xf32>
    %191 = vector.shape_cast %190 : vector<8x32xf32> to vector<1x8x32xf32>
    %c0_81 = arith.constant 0 : index
    %c0_82 = arith.constant 0 : index
    %c0_83 = arith.constant 0 : index
    %192 = vector.load %arg15[%c0_81, %c0_82, %c0_83] : memref<1x8x32xf32, #tpu.memory_space<vmem>>, vector<1x8x32xf32>
    tpu.vector_store %arg15[%c0_81, %c0_82, %c0_83], %191 {strides = array<i32>} : memref<1x8x32xf32, #tpu.memory_space<vmem>>, vector<1x8x32xf32>,
    return
  }
  func.func @transform_0(%arg0: i32, %arg1: i32) -> (i32, i32, i32) {
    %c0_i32 = arith.constant 0 : i32
    %c0_i32_0 = arith.constant 0 : i32
    %c0_i32_1 = arith.constant 0 : i32
    return %arg0, %c0_i32, %c0_i32_0 : i32, i32, i32
  }
  func.func @transform_1(%arg0: i32, %arg1: i32) -> (i32, i32, i32) {
    %c0_i32 = arith.constant 0 : i32
    %c0_i32_0 = arith.constant 0 : i32
    %c0_i32_1 = arith.constant 0 : i32
    return %arg1, %c0_i32, %c0_i32_0 : i32, i32, i32
  }
  func.func @transform_2(%arg0: i32, %arg1: i32) -> (i32, i32, i32) {
    %c0_i32 = arith.constant 0 : i32
    %c0_i32_0 = arith.constant 0 : i32
    %c0_i32_1 = arith.constant 0 : i32
    return %arg1, %c0_i32, %c0_i32_0 : i32, i32, i32
  }
  func.func @transform_3(%arg0: i32, %arg1: i32) -> (i32, i32, i32) {
    %c0_i32 = arith.constant 0 : i32
    %c0_i32_0 = arith.constant 0 : i32
    %c0_i32_1 = arith.constant 0 : i32
    return %arg1, %c0_i32, %c0_i32_0 : i32, i32, i32
  }
  func.func @transform_4(%arg0: i32, %arg1: i32) -> (i32, i32, i32) {
    %c0_i32 = arith.constant 0 : i32
    %c0_i32_0 = arith.constant 0 : i32
    %c0_i32_1 = arith.constant 0 : i32
    return %arg1, %c0_i32, %c0_i32_0 : i32, i32, i32
  }
  func.func @transform_5(%arg0: i32, %arg1: i32) -> (i32, i32, i32) {
    %c0_i32 = arith.constant 0 : i32
    %c0_i32_0 = arith.constant 0 : i32
    %c0_i32_1 = arith.constant 0 : i32
    return %arg1, %c0_i32, %c0_i32_0 : i32, i32, i32
  }
  func.func @transform_6(%arg0: i32, %arg1: i32) -> (i32, i32, i32) {
    %c0_i32 = arith.constant 0 : i32
    %c0_i32_0 = arith.constant 0 : i32
    %c0_i32_1 = arith.constant 0 : i32
    return %arg1, %c0_i32, %c0_i32_0 : i32, i32, i32
  }
  func.func @transform_7(%arg0: i32, %arg1: i32) -> (i32, i32, i32) {
    %c0_i32 = arith.constant 0 : i32
    %c0_i32_0 = arith.constant 0 : i32
    %c0_i32_1 = arith.constant 0 : i32
    return %arg1, %c0_i32, %c0_i32_0 : i32, i32, i32
  }
  func.func @transform_8(%arg0: i32, %arg1: i32) -> (i32, i32, i32) {
    %c0_i32 = arith.constant 0 : i32
    %c0_i32_0 = arith.constant 0 : i32
    %c0_i32_1 = arith.constant 0 : i32
    return %arg1, %c0_i32, %c0_i32_0 : i32, i32, i32
  }
  func.func @transform_9(%arg0: i32, %arg1: i32) -> (i32, i32, i32) {
    %c0_i32 = arith.constant 0 : i32
    %c0_i32_0 = arith.constant 0 : i32
    %c0_i32_1 = arith.constant 0 : i32
    return %arg1, %c0_i32, %c0_i32_0 : i32, i32, i32
  }
  func.func @transform_10(%arg0: i32, %arg1: i32) -> (i32, i32, i32) {
    %c0_i32 = arith.constant 0 : i32
    %c0_i32_0 = arith.constant 0 : i32
    %c0_i32_1 = arith.constant 0 : i32
    return %arg1, %c0_i32, %c0_i32_0 : i32, i32, i32
  }
  func.func @transform_11(%arg0: i32, %arg1: i32) -> (i32, i32, i32) {
    %c0_i32 = arith.constant 0 : i32
    %c0_i32_0 = arith.constant 0 : i32
    %c0_i32_1 = arith.constant 0 : i32
    return %arg1, %c0_i32, %c0_i32_0 : i32, i32, i32
  }
  func.func @transform_12(%arg0: i32, %arg1: i32) -> (i32, i32, i32) {
    %c0_i32 = arith.constant 0 : i32
    %c0_i32_0 = arith.constant 0 : i32
    %c0_i32_1 = arith.constant 0 : i32
    return %arg1, %c0_i32, %c0_i32_0 : i32, i32, i32
  }
  func.func @transform_13(%arg0: i32, %arg1: i32) -> (i32, i32, i32) {
    %c0_i32 = arith.constant 0 : i32
    %c0_i32_0 = arith.constant 0 : i32
    %c0_i32_1 = arith.constant 0 : i32
    return %arg0, %c0_i32, %c0_i32_0 : i32, i32, i32
  }
  func.func @transform_14(%arg0: i32, %arg1: i32) -> (i32, i32, i32) {
    %c0_i32 = arith.constant 0 : i32
    %c0_i32_0 = arith.constant 0 : i32
    %c0_i32_1 = arith.constant 0 : i32
    return %arg0, %c0_i32, %c0_i32_0 : i32, i32, i32
  }
}

</mosaic_0001>

<llo_original>
// kernel: tpu_custom_call.1
$region0: #{tpu_custom_call.1}
  #allocation0 [shape = 'u32[]', space=smem, size = 0x4, offset = 0x4, fixed_abs, tag = 'smem constant byte address 0x4 - core index']
  #allocation1 [shape = 'u32[72,128]{1,0:T(1,128)}', space=vmem, size = 0x9000, scoped, tag = 'internal scratch']
  #allocation2 [shape = 'f32[8,32]{1,0:T(8,128)}', space=vmem, size = 0x1000, scoped, tag = 'scratch operand']
  %s0 = inlined_call_operand.hbm [shape: f32[2,8,32], index: 0, kind: input, shape index: {}, may-alias: {0,13}]
  %s1 = inlined_call_operand.vmem [shape: bf16[2,32,96], index: 1, kind: input, shape index: {}]
  %s2 = inlined_call_operand.vmem [shape: f32[2,1,96], index: 2, kind: input, shape index: {}]
  %s3 = inlined_call_operand.vmem [shape: bf16[2,32,32], index: 3, kind: input, shape index: {}]
  %s4 = inlined_call_operand.vmem [shape: f32[2,1,32], index: 4, kind: input, shape index: {}]
  %s5 = inlined_call_operand.vmem [shape: f32[2,1,32], index: 5, kind: input, shape index: {}]
  %s6 = inlined_call_operand.vmem [shape: f32[2,1,32], index: 6, kind: input, shape index: {}]
  %s7 = inlined_call_operand.vmem [shape: bf16[2,32,64], index: 7, kind: input, shape index: {}]
  %s8 = inlined_call_operand.hbm [shape: f32[2,1,64], index: 8, kind: input, shape index: {}]
  %s9 = inlined_call_operand.vmem [shape: bf16[2,64,32], index: 9, kind: input, shape index: {}]
  %s10 = inlined_call_operand.hbm [shape: f32[2,1,32], index: 10, kind: input, shape index: {}]
  %s11 = inlined_call_operand.hbm [shape: f32[2,1,32], index: 11, kind: input, shape index: {}]
  %s12 = inlined_call_operand.vmem [shape: f32[2,1,32], index: 12, kind: input, shape index: {}]
  %s13 = inlined_call_operand.hbm [shape: f32[2,8,32], index: 13, kind: output, shape index: {0}, may-alias: {0,13}]
  %s14 = inlined_call_operand.hbm [shape: f32[2,8,8], index: 14, kind: output, shape index: {1}]
  %15 = xla_tuple %s13, %s14
  %s16 = sld [smem:[#allocation0]]
  $region129: #{tpu_custom_call.1} parent=0
    _
  %s18 = ssub.s32 1, %s16
  %s19 = scalar_select 0, %s18, %s16
  $region1: #{tpu_custom_call.1} parent=0
    #allocation3 [shape = 'u8[8192]{0}', space=vmem, size = 0x2000, scoped, tag = 'input window, operand 0']
    #allocation4 [shape = 's32[2]{0}', space=sflag, size = 0x8, scoped, tag = 'scoped memory for tpu_custom_call.1']
    #allocation5 [shape = 's32[2]{0}', space=sflag, size = 0x8, scoped, tag = 'scoped memory for tpu_custom_call.1']
    #allocation6 [shape = 'u8[1024]{0}', space=vmem, size = 0x400, scoped, tag = 'input window, operand 8']
    #allocation7 [shape = 's32[2]{0}', space=sflag, size = 0x8, scoped, tag = 'scoped memory for tpu_custom_call.1']
    #allocation8 [shape = 'u8[1024]{0}', space=vmem, size = 0x400, scoped, tag = 'input window, operand 10']
    #allocation9 [shape = 'u8[1024]{0}', space=vmem, size = 0x400, scoped, tag = 'input window, operand 11']
    #allocation10 [shape = 's32[2]{0}', space=sflag, size = 0x8, scoped, tag = 'scoped memory for tpu_custom_call.1']
    #allocation11 [shape = 'u8[8192]{0}', space=vmem, size = 0x2000, scoped, tag = 'output window, operand 0']
    #allocation12 [shape = 'u8[8192]{0}', space=vmem, size = 0x2000, scoped, tag = 'output window, operand 1']
    #allocation13 [shape = 's32[2]{0}', space=sflag, size = 0x8, scoped, tag = 'scoped memory for tpu_custom_call.1']
    %20 = vsyncpa [#allocation4], 0
    %s21 = scalar_lea.sflag [#allocation4], 1
    %22 = vsyncpa %s21, 0
    %23 = vsyncpa [#allocation7], 0
    %s24 = scalar_lea.sflag [#allocation7], 1
    %25 = vsyncpa %s24, 0
    %26 = vsyncpa [#allocation10], 0
    %s27 = scalar_lea.sflag [#allocation10], 1
    %28 = vsyncpa %s27, 0
    %29 = vsyncpa [#allocation5], 0
    %s30 = scalar_lea.sflag [#allocation5], 1
    %31 = vsyncpa %s30, 0
    %32 = vsyncpa [#allocation13], 0
    %s33 = scalar_lea.sflag [#allocation13], 1
    %34 = vsyncpa %s33, 0
    loop: start=0, step=1, limit=6
    $region2: #{tpu_custom_call.1} parent=1 // loop_pre_header
      _
    $region3: #{tpu_custom_call.1} parent=1 // loop_header
      %s36 = sphi 0, %s40
      %p37 = scmp.ge.s32.totalorder %s36, 6
      %s43 = sphi 0, %s55
      %s44 = sphi 0, %s51
      %s45 = sphi 0, %s43
      %s46 = sphi 0, %s44
      %s47 = sphi 0, %s45
      %s48 = sphi 0, %s46
      %s58 = sphi 0, %s60
      %s61 = sphi 0, %s58
      %s62 = sphi 0, %s61
      %s78 = sphi 0, %s62
      %s84 = sphi 0, %s86
      %s87 = sphi 0, %s84
      %s88 = sphi 0, %s87
      %s104 = sphi 0, %s88
      %s110 = sphi 0, %s112
      %s113 = sphi 0, %s110
      %s114 = sphi 0, %s113
      %s130 = sphi 0, %s114
      %s136 = sphi 0, %s138
      %s139 = sphi 0, %s136
      %s140 = sphi 0, %s139
      %s156 = sphi 0, %s140
      %s162 = sphi 0, %s164
      %s165 = sphi 0, %s162
      %s166 = sphi 0, %s165
      %s182 = sphi 0, %s166
      %s188 = sphi 0, %s190
      %s191 = sphi 0, %s188
      %s192 = sphi 0, %s191
      %s208 = sphi 0, %s192
      %s214 = sphi 0, %s216
      %s217 = sphi 0, %s214
      %s218 = sphi 0, %s217
      %s234 = sphi 0, %s218
      %s240 = sphi 0, %s242
      %s243 = sphi 0, %s240
      %s244 = sphi 0, %s243
      %s260 = sphi 0, %s244
      %s266 = sphi 0, %s268
      %s269 = sphi 0, %s266
      %s270 = sphi 0, %s269
      %s286 = sphi 0, %s270
      %s292 = sphi 0, %s294
      %s295 = sphi 0, %s292
      %s296 = sphi 0, %s295
      %s312 = sphi 0, %s296
      %s318 = sphi 0, %s320
      %s321 = sphi 0, %s318
      %s322 = sphi 0, %s321
      %s338 = sphi 0, %s322
      %s344 = sphi 0, %s346
      %s347 = sphi 0, %s344
      %s348 = sphi 0, %s347
      %s364 = sphi 0, %s348
      %s370 = sphi 0, %s372
      %s373 = sphi 0, %s370
      %s374 = sphi 0, %s373
      %s390 = sphi 0, %s374
      %s396 = sphi 0, %s398
      %s399 = sphi 0, %s396
      %s400 = sphi 0, %s399
      %s416 = sphi 0, %s400
      %s422 = sphi 0, %s424
      %s425 = sphi 0, %s422
      %s426 = sphi 0, %s425
      %s442 = sphi 0, %s426
    $region4: #{tpu_custom_call.1} parent=1 // loop_header_branch
      %39 = sbr.rel (%p37) target = $region8
    $region5: #{tpu_custom_call.1} parent=1 // loop_body
      %s41 = ssub.s32 %s36, 1
      %s42 = ssub.s32 %s36, 2
      %s49 = sadd.s32 1, %s44
      %p50 = scmp.ge.s32.totalorder %s49, 2
      %s51 = scalar_select %p50, 0, %s49
      %s52 = sadd.s32 1, %s43
      %s53 = scalar_select %p50, %s52, %s43
      %p54 = scmp.ge.s32.totalorder %s53, 2
      %s55 = scalar_select %p54, 0, %s53
      %s56 = ssub.s32 %s43, %s55
      %p57 = scmp.eq.s32.totalorder %s56, 0
      %s59 = sadd.s32 %s58, 1
      %s60 = scalar_select %p57, %s58, %s59
      %p63 = pneg %p57
      %p64 = scmp.eq.s32.totalorder %s36, 3
      %p65 = por %p63, %p64
      %p66 = scmp.ne.s32.totalorder %s58, %s61
      %p67 = scmp.eq.s32.totalorder %s36, 0
      %p68 = por %p66, %p67
      %p69 = scmp.ne.s32.totalorder %s58, %s61
      %p70 = scmp.eq.s32.totalorder %s41, 3
      %p71 = por %p69, %p70
      %p72 = scmp.ne.s32.totalorder %s61, %s62
      %p73 = scmp.eq.s32.totalorder %s41, 0
      %p74 = por %p72, %p73
      %p75 = scmp.ne.s32.totalorder %s61, %s62
      %p76 = scmp.eq.s32.totalorder %s42, 3
      %p77 = por %p75, %p76
      %p79 = scmp.ne.s32.totalorder %s62, %s78
      %p80 = scmp.eq.s32.totalorder %s42, 0
      %p81 = por %p79, %p80
      %s82 = ssub.s32 %s44, %s51
      %p83 = scmp.eq.s32.totalorder %s82, 0
      %s85 = sadd.s32 %s84, 1
      %s86 = scalar_select %p83, %s84, %s85
      %p89 = pneg %p83
      %p90 = scmp.eq.s32.totalorder %s36, 3
      %p91 = por %p89, %p90
      %p92 = scmp.ne.s32.totalorder %s84, %s87
      %p93 = scmp.eq.s32.totalorder %s36, 0
      %p94 = por %p92, %p93
      %p95 = scmp.ne.s32.totalorder %s84, %s87
      %p96 = scmp.eq.s32.totalorder %s41, 3
      %p97 = por %p95, %p96
      %p98 = scmp.ne.s32.totalorder %s87, %s88
      %p99 = scmp.eq.s32.totalorder %s41, 0
      %p100 = por %p98, %p99
      %p101 = scmp.ne.s32.totalorder %s87, %s88
      %p102 = scmp.eq.s32.totalorder %s42, 3
      %p103 = por %p101, %p102
      %p105 = scmp.ne.s32.totalorder %s88, %s104
      %p106 = scmp.eq.s32.totalorder %s42, 0
      %p107 = por %p105, %p106
      %s108 = ssub.s32 %s44, %s51
      %p109 = scmp.eq.s32.totalorder %s108, 0
      %s111 = sadd.s32 %s110, 1
      %s112 = scalar_select %p109, %s110, %s111
      %p115 = pneg %p109
      %p116 = scmp.eq.s32.totalorder %s36, 3
      %p117 = por %p115, %p116
      %p118 = scmp.ne.s32.totalorder %s110, %s113
      %p119 = scmp.eq.s32.totalorder %s36, 0
      %p120 = por %p118, %p119
      %p121 = scmp.ne.s32.totalorder %s110, %s113
      %p122 = scmp.eq.s32.totalorder %s41, 3
      %p123 = por %p121, %p122
      %p124 = scmp.ne.s32.totalorder %s113, %s114
      %p125 = scmp.eq.s32.totalorder %s41, 0
      %p126 = por %p124, %p125
      %p127 = scmp.ne.s32.totalorder %s113, %s114
      %p128 = scmp.eq.s32.totalorder %s42, 3
      %p129 = por %p127, %p128
      %p131 = scmp.ne.s32.totalorder %s114, %s130
      %p132 = scmp.eq.s32.totalorder %s42, 0
      %p133 = por %p131, %p132
      %s134 = ssub.s32 %s44, %s51
      %p135 = scmp.eq.s32.totalorder %s134, 0
      %s137 = sadd.s32 %s136, 1
      %s138 = scalar_select %p135, %s136, %s137
      %p141 = pneg %p135
      %p142 = scmp.eq.s32.totalorder %s36, 3
      %p143 = por %p141, %p142
      %p144 = scmp.ne.s32.totalorder %s136, %s139
      %p145 = scmp.eq.s32.totalorder %s36, 0
      %p146 = por %p144, %p145
      %p147 = scmp.ne.s32.totalorder %s136, %s139
      %p148 = scmp.eq.s32.totalorder %s41, 3
      %p149 = por %p147, %p148
      %p150 = scmp.ne.s32.totalorder %s139, %s140
      %p151 = scmp.eq.s32.totalorder %s41, 0
      %p152 = por %p150, %p151
      %p153 = scmp.ne.s32.totalorder %s139, %s140
      %p154 = scmp.eq.s32.totalorder %s42, 3
      %p155 = por %p153, %p154
      %p157 = scmp.ne.s32.totalorder %s140, %s156
      %p158 = scmp.eq.s32.totalorder %s42, 0
      %p159 = por %p157, %p158
      %s160 = ssub.s32 %s44, %s51
      %p161 = scmp.eq.s32.totalorder %s160, 0
      %s163 = sadd.s32 %s162, 1
      %s164 = scalar_select %p161, %s162, %s163
      %p167 = pneg %p161
      %p168 = scmp.eq.s32.totalorder %s36, 3
      %p169 = por %p167, %p168
      %p170 = scmp.ne.s32.totalorder %s162, %s165
      %p171 = scmp.eq.s32.totalorder %s36, 0
      %p172 = por %p170, %p171
      %p173 = scmp.ne.s32.totalorder %s162, %s165
      %p174 = scmp.eq.s32.totalorder %s41, 3
      %p175 = por %p173, %p174
      %p176 = scmp.ne.s32.totalorder %s165, %s166
      %p177 = scmp.eq.s32.totalorder %s41, 0
      %p178 = por %p176, %p177
      %p179 = scmp.ne.s32.totalorder %s165, %s166
      %p180 = scmp.eq.s32.totalorder %s42, 3
      %p181 = por %p179, %p180
      %p183 = scmp.ne.s32.totalorder %s166, %s182
      %p184 = scmp.eq.s32.totalorder %s42, 0
      %p185 = por %p183, %p184
      %s186 = ssub.s32 %s44, %s51
      %p187 = scmp.eq.s32.totalorder %s186, 0
      %s189 = sadd.s32 %s188, 1
      %s190 = scalar_select %p187, %s188, %s189
      %p193 = pneg %p187
      %p194 = scmp.eq.s32.totalorder %s36, 3
      %p195 = por %p193, %p194
      %p196 = scmp.ne.s32.totalorder %s188, %s191
      %p197 = scmp.eq.s32.totalorder %s36, 0
      %p198 = por %p196, %p197
      %p199 = scmp.ne.s32.totalorder %s188, %s191
      %p200 = scmp.eq.s32.totalorder %s41, 3
      %p201 = por %p199, %p200
      %p202 = scmp.ne.s32.totalorder %s191, %s192
      %p203 = scmp.eq.s32.totalorder %s41, 0
      %p204 = por %p202, %p203
      %p205 = scmp.ne.s32.totalorder %s191, %s192
      %p206 = scmp.eq.s32.totalorder %s42, 3
      %p207 = por %p205, %p206
      %p209 = scmp.ne.s32.totalorder %s192, %s208
      %p210 = scmp.eq.s32.totalorder %s42, 0
      %p211 = por %p209, %p210
      %s212 = ssub.s32 %s44, %s51
      %p213 = scmp.eq.s32.totalorder %s212, 0
      %s215 = sadd.s32 %s214, 1
      %s216 = scalar_select %p213, %s214, %s215
      %p219 = pneg %p213
      %p220 = scmp.eq.s32.totalorder %s36, 3
      %p221 = por %p219, %p220
      %p222 = scmp.ne.s32.totalorder %s214, %s217
      %p223 = scmp.eq.s32.totalorder %s36, 0
      %p224 = por %p222, %p223
      %p225 = scmp.ne.s32.totalorder %s214, %s217
      %p226 = scmp.eq.s32.totalorder %s41, 3
      %p227 = por %p225, %p226
      %p228 = scmp.ne.s32.totalorder %s217, %s218
      %p229 = scmp.eq.s32.totalorder %s41, 0
      %p230 = por %p228, %p229
      %p231 = scmp.ne.s32.totalorder %s217, %s218
      %p232 = scmp.eq.s32.totalorder %s42, 3
      %p233 = por %p231, %p232
      %p235 = scmp.ne.s32.totalorder %s218, %s234
      %p236 = scmp.eq.s32.totalorder %s42, 0
      %p237 = por %p235, %p236
      %s238 = ssub.s32 %s44, %s51
      %p239 = scmp.eq.s32.totalorder %s238, 0
      %s241 = sadd.s32 %s240, 1
      %s242 = scalar_select %p239, %s240, %s241
      %p245 = pneg %p239
      %p246 = scmp.eq.s32.totalorder %s36, 3
      %p247 = por %p245, %p246
      %p248 = scmp.ne.s32.totalorder %s240, %s243
      %p249 = scmp.eq.s32.totalorder %s36, 0
      %p250 = por %p248, %p249
      %p251 = scmp.ne.s32.totalorder %s240, %s243
      %p252 = scmp.eq.s32.totalorder %s41, 3
      %p253 = por %p251, %p252
      %p254 = scmp.ne.s32.totalorder %s243, %s244
      %p255 = scmp.eq.s32.totalorder %s41, 0
      %p256 = por %p254, %p255
      %p257 = scmp.ne.s32.totalorder %s243, %s244
      %p258 = scmp.eq.s32.totalorder %s42, 3
      %p259 = por %p257, %p258
      %p261 = scmp.ne.s32.totalorder %s244, %s260
      %p262 = scmp.eq.s32.totalorder %s42, 0
      %p263 = por %p261, %p262
      %s264 = ssub.s32 %s44, %s51
      %p265 = scmp.eq.s32.totalorder %s264, 0
      %s267 = sadd.s32 %s266, 1
      %s268 = scalar_select %p265, %s266, %s267
      %p271 = pneg %p265
      %p272 = scmp.eq.s32.totalorder %s36, 3
      %p273 = por %p271, %p272
      %p274 = scmp.ne.s32.totalorder %s266, %s269
      %p275 = scmp.eq.s32.totalorder %s36, 0
      %p276 = por %p274, %p275
      %p277 = scmp.ne.s32.totalorder %s266, %s269
      %p278 = scmp.eq.s32.totalorder %s41, 3
      %p279 = por %p277, %p278
      %p280 = scmp.ne.s32.totalorder %s269, %s270
      %p281 = scmp.eq.s32.totalorder %s41, 0
      %p282 = por %p280, %p281
      %p283 = scmp.ne.s32.totalorder %s269, %s270
      %p284 = scmp.eq.s32.totalorder %s42, 3
      %p285 = por %p283, %p284
      %p287 = scmp.ne.s32.totalorder %s270, %s286
      %p288 = scmp.eq.s32.totalorder %s42, 0
      %p289 = por %p287, %p288
      %s290 = ssub.s32 %s44, %s51
      %p291 = scmp.eq.s32.totalorder %s290, 0
      %s293 = sadd.s32 %s292, 1
      %s294 = scalar_select %p291, %s292, %s293
      %p297 = pneg %p291
      %p298 = scmp.eq.s32.totalorder %s36, 3
      %p299 = por %p297, %p298
      %p300 = scmp.ne.s32.totalorder %s292, %s295
      %p301 = scmp.eq.s32.totalorder %s36, 0
      %p302 = por %p300, %p301
      %p303 = scmp.ne.s32.totalorder %s292, %s295
      %p304 = scmp.eq.s32.totalorder %s41, 3
      %p305 = por %p303, %p304
      %p306 = scmp.ne.s32.totalorder %s295, %s296
      %p307 = scmp.eq.s32.totalorder %s41, 0
      %p308 = por %p306, %p307
      %p309 = scmp.ne.s32.totalorder %s295, %s296
      %p310 = scmp.eq.s32.totalorder %s42, 3
      %p311 = por %p309, %p310
      %p313 = scmp.ne.s32.totalorder %s296, %s312
      %p314 = scmp.eq.s32.totalorder %s42, 0
      %p315 = por %p313, %p314
      %s316 = ssub.s32 %s44, %s51
      %p317 = scmp.eq.s32.totalorder %s316, 0
      %s319 = sadd.s32 %s318, 1
      %s320 = scalar_select %p317, %s318, %s319
      %p323 = pneg %p317
      %p324 = scmp.eq.s32.totalorder %s36, 3
      %p325 = por %p323, %p324
      %p326 = scmp.ne.s32.totalorder %s318, %s321
      %p327 = scmp.eq.s32.totalorder %s36, 0
      %p328 = por %p326, %p327
      %p329 = scmp.ne.s32.totalorder %s318, %s321
      %p330 = scmp.eq.s32.totalorder %s41, 3
      %p331 = por %p329, %p330
      %p332 = scmp.ne.s32.totalorder %s321, %s322
      %p333 = scmp.eq.s32.totalorder %s41, 0
      %p334 = por %p332, %p333
      %p335 = scmp.ne.s32.totalorder %s321, %s322
      %p336 = scmp.eq.s32.totalorder %s42, 3
      %p337 = por %p335, %p336
      %p339 = scmp.ne.s32.totalorder %s322, %s338
      %p340 = scmp.eq.s32.totalorder %s42, 0
      %p341 = por %p339, %p340
      %s342 = ssub.s32 %s44, %s51
      %p343 = scmp.eq.s32.totalorder %s342, 0
      %s345 = sadd.s32 %s344, 1
      %s346 = scalar_select %p343, %s344, %s345
      %p349 = pneg %p343
      %p350 = scmp.eq.s32.totalorder %s36, 3
      %p351 = por %p349, %p350
      %p352 = scmp.ne.s32.totalorder %s344, %s347
      %p353 = scmp.eq.s32.totalorder %s36, 0
      %p354 = por %p352, %p353
      %p355 = scmp.ne.s32.totalorder %s344, %s347
      %p356 = scmp.eq.s32.totalorder %s41, 3
      %p357 = por %p355, %p356
      %p358 = scmp.ne.s32.totalorder %s347, %s348
      %p359 = scmp.eq.s32.totalorder %s41, 0
      %p360 = por %p358, %p359
      %p361 = scmp.ne.s32.totalorder %s347, %s348
      %p362 = scmp.eq.s32.totalorder %s42, 3
      %p363 = por %p361, %p362
      %p365 = scmp.ne.s32.totalorder %s348, %s364
      %p366 = scmp.eq.s32.totalorder %s42, 0
      %p367 = por %p365, %p366
      %s368 = ssub.s32 %s44, %s51
      %p369 = scmp.eq.s32.totalorder %s368, 0
      %s371 = sadd.s32 %s370, 1
      %s372 = scalar_select %p369, %s370, %s371
      %p375 = pneg %p369
      %p376 = scmp.eq.s32.totalorder %s36, 3
      %p377 = por %p375, %p376
      %p378 = scmp.ne.s32.totalorder %s370, %s373
      %p379 = scmp.eq.s32.totalorder %s36, 0
      %p380 = por %p378, %p379
      %p381 = scmp.ne.s32.totalorder %s370, %s373
      %p382 = scmp.eq.s32.totalorder %s41, 3
      %p383 = por %p381, %p382
      %p384 = scmp.ne.s32.totalorder %s373, %s374
      %p385 = scmp.eq.s32.totalorder %s41, 0
      %p386 = por %p384, %p385
      %p387 = scmp.ne.s32.totalorder %s373, %s374
      %p388 = scmp.eq.s32.totalorder %s42, 3
      %p389 = por %p387, %p388
      %p391 = scmp.ne.s32.totalorder %s374, %s390
      %p392 = scmp.eq.s32.totalorder %s42, 0
      %p393 = por %p391, %p392
      %s394 = ssub.s32 %s43, %s55
      %p395 = scmp.eq.s32.totalorder %s394, 0
      %s397 = sadd.s32 %s396, 1
      %s398 = scalar_select %p395, %s396, %s397
      %p401 = pneg %p395
      %p402 = scmp.eq.s32.totalorder %s36, 3
      %p403 = por %p401, %p402
      %p404 = scmp.ne.s32.totalorder %s396, %s399
      %p405 = scmp.eq.s32.totalorder %s36, 0
      %p406 = por %p404, %p405
      %p407 = scmp.ne.s32.totalorder %s396, %s399
      %p408 = scmp.eq.s32.totalorder %s41, 3
      %p409 = por %p407, %p408
      %p410 = scmp.ne.s32.totalorder %s399, %s400
      %p411 = scmp.eq.s32.totalorder %s41, 0
      %p412 = por %p410, %p411
      %p413 = scmp.ne.s32.totalorder %s399, %s400
      %p414 = scmp.eq.s32.totalorder %s42, 3
      %p415 = por %p413, %p414
      %p417 = scmp.ne.s32.totalorder %s400, %s416
      %p418 = scmp.eq.s32.totalorder %s42, 0
      %p419 = por %p417, %p418
      %s420 = ssub.s32 %s43, %s55
      %p421 = scmp.eq.s32.totalorder %s420, 0
      %s423 = sadd.s32 %s422, 1
      %s424 = scalar_select %p421, %s422, %s423
      %p427 = pneg %p421
      %p428 = scmp.eq.s32.totalorder %s36, 3
      %p429 = por %p427, %p428
      %p430 = scmp.ne.s32.totalorder %s422, %s425
      %p431 = scmp.eq.s32.totalorder %s36, 0
      %p432 = por %p430, %p431
      %p433 = scmp.ne.s32.totalorder %s422, %s425
      %p434 = scmp.eq.s32.totalorder %s41, 3
      %p435 = por %p433, %p434
      %p436 = scmp.ne.s32.totalorder %s425, %s426
      %p437 = scmp.eq.s32.totalorder %s41, 0
      %p438 = por %p436, %p437
      %p439 = scmp.ne.s32.totalorder %s425, %s426
      %p440 = scmp.eq.s32.totalorder %s42, 3
      %p441 = por %p439, %p440
      %p443 = scmp.ne.s32.totalorder %s426, %s442
      %p444 = scmp.eq.s32.totalorder %s42, 0
      %p445 = por %p443, %p444
      %p446 = scmp.le.s32.totalorder 1, %s36
      %p447 = scmp.lt.s32.totalorder %s36, 5
      %p448 = pnand %p446, %p447
      %p449 = pneg %p448
      // Predicated region
      $region9: #{tpu_custom_call.1} parent=5 // pred_check
        _
      $region10: #{tpu_custom_call.1} parent=5 // pred_check_branch
        %451 = sbr.rel (%p448) target = $region12
      $region11: #{tpu_custom_call.1} parent=5 // pred_region
        %s452 = ssub.s32 %s36, 1
      $region12: #{tpu_custom_call.1} parent=5 // pred_fallthru
        _
      %p453 = scmp.lt.s32.totalorder %s36, 4
      // Predicated region
      $region13: #{tpu_custom_call.1} parent=5 // pred_check
        %p454 = pneg %p453
      $region14: #{tpu_custom_call.1} parent=5 // pred_check_branch
        %456 = sbr.rel (%p454) target = $region16
      $region15: #{tpu_custom_call.1} parent=5 // pred_region
        // Predicated region
        $region17: #{tpu_custom_call.1} parent=15 // pred_check
          %p457 = pneg %p68
        $region18: #{tpu_custom_call.1} parent=15 // pred_check_branch
          %459 = sbr.rel (%p457) target = $region20
        $region19: #{tpu_custom_call.1} parent=15 // pred_region
          %s460 = sand.u32 %s58, 1
          %s461 = scalar_lea.sflag [#allocation4], %s460
          %s462 = sand.u32 %s58, 1
          %s463 = smul.addr %s462, 8
          %s464 = scalar_lea.vmem [#allocation3], %s463
          %466 = vsyncadd %s461, 0
          %s467 = smul.addr %s43, 8
          %s468 = scalar_lea.hbm %s0, %s467
          %s470 = sshll.u32 %s468, 4
          %s471 = int_to_ptr.hbm [resolvable:$true] %s470
          %s472 = sshll.u32 %s464, 4
          %s473 = int_to_ptr.vmem [resolvable:$true] %s472
          %475 = dma.hbm_to_vmem [thread:$0]  %s471, 128, %s473, %s461
        $region20: #{tpu_custom_call.1} parent=15 // pred_fallthru
          _
        // Predicated region
        $region21: #{tpu_custom_call.1} parent=15 // pred_check
          %p476 = pneg %p94
        $region22: #{tpu_custom_call.1} parent=15 // pred_check_branch
          %478 = sbr.rel (%p476) target = $region24
        $region23: #{tpu_custom_call.1} parent=15 // pred_region
          %p479 = scmp.lt.s32.totalorder %s44, 1
          %s480 = scalar_select %p479, %s44, 1
          %s481 = smul.addr %s480, 4
          %s482 = smul.addr %s481, 4
          %s483 = scalar_lea.vmem %s1, %s482
        $region24: #{tpu_custom_call.1} parent=15 // pred_fallthru
          _
        // Predicated region
        $region25: #{tpu_custom_call.1} parent=15 // pred_check
          %p484 = pneg %p120
        $region26: #{tpu_custom_call.1} parent=15 // pred_check_branch
          %486 = sbr.rel (%p484) target = $region28
        $region27: #{tpu_custom_call.1} parent=15 // pred_region
          %p487 = scmp.lt.s32.totalorder %s44, 1
          %s488 = scalar_select %p487, %s44, 1
          %s489 = scalar_lea.vmem %s2, %s488
        $region28: #{tpu_custom_call.1} parent=15 // pred_fallthru
          _
        // Predicated region
        $region29: #{tpu_custom_call.1} parent=15 // pred_check
          %p490 = pneg %p146
        $region30: #{tpu_custom_call.1} parent=15 // pred_check_branch
          %492 = sbr.rel (%p490) target = $region32
        $region31: #{tpu_custom_call.1} parent=15 // pred_region
          %p493 = scmp.lt.s32.totalorder %s44, 1
          %s494 = scalar_select %p493, %s44, 1
          %s495 = smul.addr %s494, 4
          %s496 = smul.addr %s495, 4
          %s497 = scalar_lea.vmem %s3, %s496
        $region32: #{tpu_custom_call.1} parent=15 // pred_fallthru
          _
        // Predicated region
        $region33: #{tpu_custom_call.1} parent=15 // pred_check
          %p498 = pneg %p172
        $region34: #{tpu_custom_call.1} parent=15 // pred_check_branch
          %500 = sbr.rel (%p498) target = $region36
        $region35: #{tpu_custom_call.1} parent=15 // pred_region
          %p501 = scmp.lt.s32.totalorder %s44, 1
          %s502 = scalar_select %p501, %s44, 1
          %s503 = scalar_lea.vmem %s4, %s502
        $region36: #{tpu_custom_call.1} parent=15 // pred_fallthru
          _
        // Predicated region
        $region37: #{tpu_custom_call.1} parent=15 // pred_check
          %p504 = pneg %p198
        $region38: #{tpu_custom_call.1} parent=15 // pred_check_branch
          %506 = sbr.rel (%p504) target = $region40
        $region39: #{tpu_custom_call.1} parent=15 // pred_region
          %p507 = scmp.lt.s32.totalorder %s44, 1
          %s508 = scalar_select %p507, %s44, 1
          %s509 = scalar_lea.vmem %s5, %s508
        $region40: #{tpu_custom_call.1} parent=15 // pred_fallthru
          _
        // Predicated region
        $region41: #{tpu_custom_call.1} parent=15 // pred_check
          %p510 = pneg %p224
        $region42: #{tpu_custom_call.1} parent=15 // pred_check_branch
          %512 = sbr.rel (%p510) target = $region44
        $region43: #{tpu_custom_call.1} parent=15 // pred_region
          %p513 = scmp.lt.s32.totalorder %s44, 1
          %s514 = scalar_select %p513, %s44, 1
          %s515 = scalar_lea.vmem %s6, %s514
        $region44: #{tpu_custom_call.1} parent=15 // pred_fallthru
          _
        // Predicated region
        $region45: #{tpu_custom_call.1} parent=15 // pred_check
          %p516 = pneg %p250
        $region46: #{tpu_custom_call.1} parent=15 // pred_check_branch
          %518 = sbr.rel (%p516) target = $region48
        $region47: #{tpu_custom_call.1} parent=15 // pred_region
          %p519 = scmp.lt.s32.totalorder %s44, 1
          %s520 = scalar_select %p519, %s44, 1
          %s521 = smul.addr %s520, 4
          %s522 = smul.addr %s521, 4
          %s523 = scalar_lea.vmem %s7, %s522
        $region48: #{tpu_custom_call.1} parent=15 // pred_fallthru
          _
        // Predicated region
        $region49: #{tpu_custom_call.1} parent=15 // pred_check
          %p524 = pneg %p276
        $region50: #{tpu_custom_call.1} parent=15 // pred_check_branch
          %526 = sbr.rel (%p524) target = $region52
        $region51: #{tpu_custom_call.1} parent=15 // pred_region
          %s527 = sand.u32 %s36, 1
          %s528 = scalar_lea.sflag [#allocation7], %s527
          %s529 = sand.u32 %s266, 1
          %s530 = scalar_lea.vmem [#allocation6], %s529
          %532 = vsyncadd %s528, 0
          %s533 = scalar_lea.hbm %s8, %s44
          %s535 = sshll.u32 %s533, 4
          %s536 = int_to_ptr.hbm [resolvable:$true] %s535
          %s537 = sshll.u32 %s530, 4
          %s538 = int_to_ptr.vmem [resolvable:$true] %s537
          %540 = dma.hbm_to_vmem [thread:$0]  %s536, 16, %s538, %s528
        $region52: #{tpu_custom_call.1} parent=15 // pred_fallthru
          _
        // Predicated region
        $region53: #{tpu_custom_call.1} parent=15 // pred_check
          %p541 = pneg %p302
        $region54: #{tpu_custom_call.1} parent=15 // pred_check_branch
          %543 = sbr.rel (%p541) target = $region56
        $region55: #{tpu_custom_call.1} parent=15 // pred_region
          %p544 = scmp.lt.s32.totalorder %s44, 1
          %s545 = scalar_select %p544, %s44, 1
          %s546 = smul.addr %s545, 8
          %s547 = smul.addr %s546, 4
          %s548 = scalar_lea.vmem %s9, %s547
        $region56: #{tpu_custom_call.1} parent=15 // pred_fallthru
          _
        // Predicated region
        $region57: #{tpu_custom_call.1} parent=15 // pred_check
          %p549 = pneg %p328
        $region58: #{tpu_custom_call.1} parent=15 // pred_check_branch
          %551 = sbr.rel (%p549) target = $region60
        $region59: #{tpu_custom_call.1} parent=15 // pred_region
          %s552 = sand.u32 %s36, 1
          %s553 = scalar_lea.sflag [#allocation7], %s552
          %s554 = sand.u32 %s318, 1
          %s555 = scalar_lea.vmem [#allocation8], %s554
          %557 = vsyncadd %s553, 0
          %s558 = scalar_lea.hbm %s10, %s44
          %s560 = sshll.u32 %s558, 4
          %s561 = int_to_ptr.hbm [resolvable:$true] %s560
          %s562 = sshll.u32 %s555, 4
          %s563 = int_to_ptr.vmem [resolvable:$true] %s562
          %565 = dma.hbm_to_vmem [thread:$0]  %s561, 16, %s563, %s553
        $region60: #{tpu_custom_call.1} parent=15 // pred_fallthru
          _
        // Predicated region
        $region61: #{tpu_custom_call.1} parent=15 // pred_check
          %p566 = pneg %p354
        $region62: #{tpu_custom_call.1} parent=15 // pred_check_branch
          %568 = sbr.rel (%p566) target = $region64
        $region63: #{tpu_custom_call.1} parent=15 // pred_region
          %s569 = sand.u32 %s344, 1
          %s570 = scalar_lea.sflag [#allocation10], %s569
          %s571 = sand.u32 %s344, 1
          %s572 = scalar_lea.vmem [#allocation9], %s571
          %574 = vsyncadd %s570, 0
          %s575 = scalar_lea.hbm %s11, %s44
          %s577 = sshll.u32 %s575, 4
          %s578 = int_to_ptr.hbm [resolvable:$true] %s577
          %s579 = sshll.u32 %s572, 4
          %s580 = int_to_ptr.vmem [resolvable:$true] %s579
          %582 = dma.hbm_to_vmem [thread:$0]  %s578, 16, %s580, %s570
        $region64: #{tpu_custom_call.1} parent=15 // pred_fallthru
          _
        // Predicated region
        $region65: #{tpu_custom_call.1} parent=15 // pred_check
          %p583 = pneg %p380
        $region66: #{tpu_custom_call.1} parent=15 // pred_check_branch
          %585 = sbr.rel (%p583) target = $region68
        $region67: #{tpu_custom_call.1} parent=15 // pred_region
          %p586 = scmp.lt.s32.totalorder %s44, 1
          %s587 = scalar_select %p586, %s44, 1
          %s588 = scalar_lea.vmem %s12, %s587
        $region68: #{tpu_custom_call.1} parent=15 // pred_fallthru
          _
      $region16: #{tpu_custom_call.1} parent=5 // pred_fallthru
        _
      %p589 = scmp.le.s32.totalorder 1, %s36
      %p590 = scmp.lt.s32.totalorder %s36, 5
      %p591 = pnand %p589, %p590
      %p592 = pneg %p591
      // Predicated region
      $region69: #{tpu_custom_call.1} parent=5 // pred_check
        _
      $region70: #{tpu_custom_call.1} parent=5 // pred_check_branch
        %594 = sbr.rel (%p591) target = $region72
      $region71: #{tpu_custom_call.1} parent=5 // pred_region
        %s595 = ssub.s32 %s36, 1
        %s596 = sand.u32 %s61, 1
        %s597 = scalar_lea.sflag [#allocation4], %s596
        %s598 = sand.u32 %s61, 1
        %s599 = smul.addr %s598, 8
        %s600 = scalar_lea.vmem [#allocation3], %s599
        // Predicated region
        $region73: #{tpu_custom_call.1} parent=71 // pred_check
          %p601 = pneg %p74
        $region74: #{tpu_custom_call.1} parent=71 // pred_check_branch
          %603 = sbr.rel (%p601) target = $region76
        $region75: #{tpu_custom_call.1} parent=71 // pred_region
          %605 = dma.done %s597, 128
        $region76: #{tpu_custom_call.1} parent=71 // pred_fallthru
          _
        %s606 = sand.u32 %s41, 1
        %s607 = scalar_lea.sflag [#allocation7], %s606
        %s608 = sand.u32 %s269, 1
        %s609 = scalar_lea.vmem [#allocation6], %s608
        // Predicated region
        $region77: #{tpu_custom_call.1} parent=71 // pred_check
          %p610 = pneg %p282
        $region78: #{tpu_custom_call.1} parent=71 // pred_check_branch
          %612 = sbr.rel (%p610) target = $region80
        $region79: #{tpu_custom_call.1} parent=71 // pred_region
          %614 = dma.done %s607, 16
        $region80: #{tpu_custom_call.1} parent=71 // pred_fallthru
          _
        %s615 = sand.u32 %s41, 1
        %s616 = scalar_lea.sflag [#allocation7], %s615
        %s617 = sand.u32 %s321, 1
        %s618 = scalar_lea.vmem [#allocation8], %s617
        // Predicated region
        $region81: #{tpu_custom_call.1} parent=71 // pred_check
          %p619 = pneg %p334
        $region82: #{tpu_custom_call.1} parent=71 // pred_check_branch
          %621 = sbr.rel (%p619) target = $region84
        $region83: #{tpu_custom_call.1} parent=71 // pred_region
          %623 = dma.done %s616, 16
        $region84: #{tpu_custom_call.1} parent=71 // pred_fallthru
          _
        %s624 = sand.u32 %s347, 1
        %s625 = scalar_lea.sflag [#allocation10], %s624
        %s626 = sand.u32 %s347, 1
        %s627 = scalar_lea.vmem [#allocation9], %s626
        // Predicated region
        $region85: #{tpu_custom_call.1} parent=71 // pred_check
          %p628 = pneg %p360
        $region86: #{tpu_custom_call.1} parent=71 // pred_check_branch
          %630 = sbr.rel (%p628) target = $region88
        $region87: #{tpu_custom_call.1} parent=71 // pred_region
          %632 = dma.done %s625, 16
        $region88: #{tpu_custom_call.1} parent=71 // pred_fallthru
          _
        %s633 = sand.u32 %s61, 1
        %s634 = scalar_lea.sflag [#allocation4], %s633
        %s635 = sand.u32 %s61, 1
        %s636 = smul.addr %s635, 8
        %s637 = scalar_lea.vmem [#allocation3], %s636
        %p638 = pneg %p74
        %p639 = pneg %p71
        %p640 = scmp.lt.s32.totalorder %s46, 1
        %s641 = scalar_select %p640, %s46, 1
        %s642 = smul.addr %s641, 4
        %s643 = smul.addr %s642, 4
        %s644 = scalar_lea.vmem %s1, %s643
        %p645 = pneg %p100
        %p646 = pneg %p97
        %p647 = scmp.lt.s32.totalorder %s46, 1
        %s648 = scalar_select %p647, %s46, 1
        %s649 = scalar_lea.vmem %s2, %s648
        %p650 = pneg %p126
        %p651 = pneg %p123
        %p652 = scmp.lt.s32.totalorder %s46, 1
        %s653 = scalar_select %p652, %s46, 1
        %s654 = smul.addr %s653, 4
        %s655 = smul.addr %s654, 4
        %s656 = scalar_lea.vmem %s3, %s655
        %p657 = pneg %p152
        %p658 = pneg %p149
        %p659 = scmp.lt.s32.totalorder %s46, 1
        %s660 = scalar_select %p659, %s46, 1
        %s661 = scalar_lea.vmem %s4, %s660
        %p662 = pneg %p178
        %p663 = pneg %p175
        %p664 = scmp.lt.s32.totalorder %s46, 1
        %s665 = scalar_select %p664, %s46, 1
        %s666 = scalar_lea.vmem %s5, %s665
        %p667 = pneg %p204
        %p668 = pneg %p201
        %p669 = scmp.lt.s32.totalorder %s46, 1
        %s670 = scalar_select %p669, %s46, 1
        %s671 = scalar_lea.vmem %s6, %s670
        %p672 = pneg %p230
        %p673 = pneg %p227
        %p674 = scmp.lt.s32.totalorder %s46, 1
        %s675 = scalar_select %p674, %s46, 1
        %s676 = smul.addr %s675, 4
        %s677 = smul.addr %s676, 4
        %s678 = scalar_lea.vmem %s7, %s677
        %p679 = pneg %p256
        %p680 = pneg %p253
        %s681 = sand.u32 %s41, 1
        %s682 = scalar_lea.sflag [#allocation7], %s681
        %s683 = sand.u32 %s269, 1
        %s684 = scalar_lea.vmem [#allocation6], %s683
        %p685 = pneg %p282
        %p686 = pneg %p279
        %p687 = scmp.lt.s32.totalorder %s46, 1
        %s688 = scalar_select %p687, %s46, 1
        %s689 = smul.addr %s688, 8
        %s690 = smul.addr %s689, 4
        %s691 = scalar_lea.vmem %s9, %s690
        %p692 = pneg %p308
        %p693 = pneg %p305
        %s694 = sand.u32 %s41, 1
        %s695 = scalar_lea.sflag [#allocation7], %s694
        %s696 = sand.u32 %s321, 1
        %s697 = scalar_lea.vmem [#allocation8], %s696
        %p698 = pneg %p334
        %p699 = pneg %p331
        %s700 = sand.u32 %s347, 1
        %s701 = scalar_lea.sflag [#allocation10], %s700
        %s702 = sand.u32 %s347, 1
        %s703 = scalar_lea.vmem [#allocation9], %s702
        %p704 = pneg %p360
        %p705 = pneg %p357
        %p706 = scmp.lt.s32.totalorder %s46, 1
        %s707 = scalar_select %p706, %s46, 1
        %s708 = scalar_lea.vmem %s12, %s707
        %p709 = pneg %p386
        %p710 = pneg %p383
        %p711 = pneg %p412
        %p712 = pneg %p409
        %s713 = sand.u32 %s399, 1
        %s714 = scalar_lea.sflag [#allocation5], %s713
        %s715 = sand.u32 %s399, 1
        %s716 = smul.addr %s715, 8
        %s717 = scalar_lea.vmem [#allocation11], %s716
        %p718 = pneg %p438
        %p719 = pneg %p435
        %s720 = sand.u32 %s425, 1
        %s721 = scalar_lea.sflag [#allocation13], %s720
        %s722 = sand.u32 %s425, 1
        %s723 = smul.addr %s722, 8
        %s724 = scalar_lea.vmem [#allocation12], %s723
        %p725 = scmp.lt.s32.totalorder %s46, 1
        %s726 = scalar_select %p725, %s46, 1
        %s727 = smul.addr %s726, 4
        %s728 = smul.addr %s727, 4
        %s729 = scalar_lea.vmem %s1, %s728
        %p730 = scmp.lt.s32.totalorder %s46, 1
        %s731 = scalar_select %p730, %s46, 1
        %s732 = scalar_lea.vmem %s2, %s731
        %p733 = scmp.lt.s32.totalorder %s46, 1
        %s734 = scalar_select %p733, %s46, 1
        %s735 = smul.addr %s734, 4
        %s736 = smul.addr %s735, 4
        %s737 = scalar_lea.vmem %s3, %s736
        %p738 = scmp.lt.s32.totalorder %s46, 1
        %s739 = scalar_select %p738, %s46, 1
        %s740 = scalar_lea.vmem %s4, %s739
        %p741 = scmp.lt.s32.totalorder %s46, 1
        %s742 = scalar_select %p741, %s46, 1
        %s743 = scalar_lea.vmem %s5, %s742
        %p744 = scmp.lt.s32.totalorder %s46, 1
        %s745 = scalar_select %p744, %s46, 1
        %s746 = scalar_lea.vmem %s6, %s745
        %p747 = scmp.lt.s32.totalorder %s46, 1
        %s748 = scalar_select %p747, %s46, 1
        %s749 = smul.addr %s748, 4
        %s750 = smul.addr %s749, 4
        %s751 = scalar_lea.vmem %s7, %s750
        %p752 = scmp.lt.s32.totalorder %s46, 1
        %s753 = scalar_select %p752, %s46, 1
        %s754 = smul.addr %s753, 8
        %s755 = smul.addr %s754, 4
        %s756 = scalar_lea.vmem %s9, %s755
        %p757 = scmp.lt.s32.totalorder %s46, 1
        %s758 = scalar_select %p757, %s46, 1
        %s759 = scalar_lea.vmem %s12, %s758
        %p761 = scmp.eq.s32.totalorder %s46, 0
        // Predicated region
        $region89: #{tpu_custom_call.1} parent=71 // pred_check
          %p762 = pneg %p761
        $region90: #{tpu_custom_call.1} parent=71 // pred_check_branch
          %764 = sbr.rel (%p762) target = $region92
        $region91: #{tpu_custom_call.1} parent=71 // pred_region
          %v765 = vld [vmem:[%s600] sm:$0xff]
          %vm766 = vcmask 261120
          %767 = vst.msk [vmem:[%s717] sm:$0xff] %vm766, %v765
        $region92: #{tpu_custom_call.1} parent=71 // pred_fallthru
          _
        %v768 = vld [vmem:[%s717] sm:$0xff]
        %v769 = vpack.c.bf16 %v768, %v768
        %v770 = vld [vmem:[%s729] sm:$0xf]
        %v771 = vld [vmem:[%s729 + $0x4] sm:$0xf]
        %v772 = vld [vmem:[%s729 + $0x8] sm:$0xf]
        %v773 = vld [vmem:[%s729 + $0xc] sm:$0xf]
        %v774 = vld [vmem:[%s732] sm:$0x1]
        %v776 = vperm.slane %v774, 0
        %v782 = vunpack.c.l.b16 %v770
        %v783 = vunpack.c.l.b16 %v771
        %v784 = vunpack.c.l.b16 %v772
        %v785 = vunpack.c.l.b16 %v773
        %v786 = vpack.c.b16 %v783, %v782
        %v787 = vpack.c.b16 %v785, %v784
        %vm790 = vcmask 261120
        %v792 = vsel %vm790, %v769, 0
        %794 = vmatpush.bf16.msra.mxu0 0
        %795 = vmatpush.bf16.msra.mxu0 0
        %796 = vmatpush.bf16.msra.mxu0 0
        %797 = vmatpush.bf16.msra.mxu0 0
        %798 = vmatpush.bf16.msra.mxu0 0
        %799 = vmatpush.bf16.msra.mxu0 0
        %800 = vmatpush.bf16.msra.mxu0 %v787
        %801 = vmatpush.bf16.msra.mxu0 %v786
        %802 = vmatmul.bf16.gmra.mxu0 %v792
        %v803 = vpop.f32.mrf.mxu0
        %v804 = vadd.f32 %v776, %v803
        %v805 = vpop.f32.mrf.mxu0
        %806 = vdwg.mxu0
        %v807 = vmul.f32 %v804, 0.35355338
        %v808 = vpack.c.bf16 %v807, %v807
        %v809 = vpack.c.bf16 %v804, %v804
        %p810 = scmp.eq.s32.totalorder %s46, 1
        %v812 = vunpack.c.l.b16 %v809
        %v813 = vpack.c.b16 %v812, %v812
        %814 = vrot.lane.b32.xlu0 %v813, 96
        %v815 = vpop.permute.xlu0 %814
        %vm816 = vcmask 64512
        %v818 = vsel %vm816, %v808, 0
        %v821 = vsel %vm816, %v815, 0
        %823 = vmatpush.bf16.xpose.msra.mxu0 0
        %824 = vmatpush.bf16.xpose.msra.mxu0 0
        %825 = vmatpush.bf16.xpose.msra.mxu0 0
        %826 = vmatpush.bf16.xpose.msra.mxu0 0
        %827 = vmatpush.bf16.xpose.msra.mxu0 0
        %828 = vmatpush.bf16.xpose.msra.mxu0 0
        %829 = vmatpush.bf16.xpose.msra.mxu0 0
        %830 = vmatpush.bf16.xpose.msra.mxu0 %v821
        %831 = vmatmul.bf16.gmra.mxu0 %v818
        %v832 = vpop.f32.mrf.mxu0
        %v833 = vadd.f32 0.0, %v832
        %v834 = vpop.f32.mrf.mxu0
        %835 = vdwg.mxu0
        %v836 = vsel %vm816, %v833, -inf
        %837 = vmax.xlane.f32.xlu0 %v836
        %v838 = vpop.xlane.xlu0 %837
        %v839 = vsub.f32 %v833, %v838
        %v840 = vmul.f32 %v839, 1.442695
        %v841 = vpow.pop %v840
        %v842 = vsel %vm816, %v841, 0.0
        %843 = vadd.xlane.f32.xlu0 %v842
        %v844 = vpop.xlane.xlu0 %843
        %v845 = vrcp.pop %v844
        %v846 = vmul.f32 %v844, %v845
        %v847 = vsub.f32 1.0, %v846
        %v848 = vmul.f32 %v845, %v847
        %v849 = vadd.f32 %v845, %v848
        %vm850 = vweird.f32 %v844
        %vm851 = vweird.f32 %v845
        %vm852 = vmor %vm850, %vm851
        %v853 = vsel %vm852, %v845, %v849
        %v854 = vand.u32 2147483647, %v844
        %vm855 = vcmp.eq.f32.partialorder %v854, 8.507059e+37
        %v856 = vand.u32 %v844, 2147483648
        %v857 = vor.u32 1.1754944e-38, %v856
        %v858 = vsel %vm855, %v857, %v853
        %v859 = vmul.f32 %v841, %v858
        // Predicated region
        $region93: #{tpu_custom_call.1} parent=71 // pred_check
          %p860 = pneg %p810
        $region94: #{tpu_custom_call.1} parent=71 // pred_check_branch
          %862 = sbr.rel (%p860) target = $region96
        $region95: #{tpu_custom_call.1} parent=71 // pred_region
          %v863 = vmul.f32 %v859, 0.25
          %864 = vst.msk [vmem:[%s724] sm:$0xff] %vm816, %v863
        $region96: #{tpu_custom_call.1} parent=71 // pred_fallthru
          _
        %v865 = vpack.c.bf16 %v859, %v859
        %866 = vrot.lane.b32.xlu0 %v813, 64
        %v867 = vpop.permute.xlu0 %866
        %v869 = vsel %vm816, %v865, 0
        %vm871 = vcmask 1043456
        %v873 = vsel %vm871, %v867, 0
        %875 = vmatpush.bf16.msra.mxu0 0
        %876 = vmatpush.bf16.msra.mxu0 0
        %877 = vmatpush.bf16.msra.mxu0 0
        %878 = vmatpush.bf16.msra.mxu0 0
        %879 = vmatpush.bf16.msra.mxu0 0
        %880 = vmatpush.bf16.msra.mxu0 0
        %881 = vmatpush.bf16.msra.mxu0 0
        %882 = vmatpush.bf16.msra.mxu0 %v873
        %883 = vmatmul.bf16.gmra.mxu0 %v869
        %v884 = vpop.f32.mrf.mxu0
        %v885 = vadd.f32 0.0, %v884
        %v886 = vpop.f32.mrf.mxu0
        %887 = vdwg.mxu0
        %888 = vst.msk [vmem:[#allocation2] sm:$0xff] %vm816, %v885
        %v890 = vunpack.c.l.b16 %v808
        %v891 = vpack.c.b16 %v890, %v890
        %892 = vrot.lane.b32.xlu0 %v891, 120
        %v893 = vpop.permute.xlu0 %892
        %894 = vrot.lane.b32.xlu0 %v813, 88
        %v895 = vpop.permute.xlu0 %894
        %v897 = vsel %vm816, %v893, 0
        %v900 = vsel %vm816, %v895, 0
        %902 = vmatpush.bf16.xpose.msra.mxu0 0
        %903 = vmatpush.bf16.xpose.msra.mxu0 0
        %904 = vmatpush.bf16.xpose.msra.mxu0 0
        %905 = vmatpush.bf16.xpose.msra.mxu0 0
        %906 = vmatpush.bf16.xpose.msra.mxu0 0
        %907 = vmatpush.bf16.xpose.msra.mxu0 0
        %908 = vmatpush.bf16.xpose.msra.mxu0 0
        %909 = vmatpush.bf16.xpose.msra.mxu0 %v900
        %910 = vmatmul.bf16.gmra.mxu0 %v897
        %v911 = vpop.f32.mrf.mxu0
        %v912 = vadd.f32 0.0, %v911
        %v913 = vpop.f32.mrf.mxu0
        %914 = vdwg.mxu0
        %v915 = vsel %vm816, %v912, -inf
        %916 = vmax.xlane.f32.xlu0 %v915
        %v917 = vpop.xlane.xlu0 %916
        %v918 = vsub.f32 %v912, %v917
        %v919 = vmul.f32 %v918, 1.442695
        %v920 = vpow.pop %v919
        %v921 = vsel %vm816, %v920, 0.0
        %922 = vadd.xlane.f32.xlu0 %v921
        %v923 = vpop.xlane.xlu0 %922
        %v924 = vrcp.pop %v923
        %v925 = vmul.f32 %v923, %v924
        %v926 = vsub.f32 1.0, %v925
        %v927 = vmul.f32 %v924, %v926
        %v928 = vadd.f32 %v924, %v927
        %vm929 = vweird.f32 %v923
        %vm930 = vweird.f32 %v924
        %vm931 = vmor %vm929, %vm930
        %v932 = vsel %vm931, %v924, %v928
        %v933 = vand.u32 2147483647, %v923
        %vm934 = vcmp.eq.f32.partialorder %v933, 8.507059e+37
        %v935 = vand.u32 %v923, 2147483648
        %v936 = vor.u32 1.1754944e-38, %v935
        %v937 = vsel %vm934, %v936, %v932
        %v938 = vmul.f32 %v920, %v937
        // Predicated region
        $region97: #{tpu_custom_call.1} parent=71 // pred_check
          %p939 = pneg %p810
        $region98: #{tpu_custom_call.1} parent=71 // pred_check_branch
          %941 = sbr.rel (%p939) target = $region100
        $region99: #{tpu_custom_call.1} parent=71 // pred_region
          %v942 = vmul.f32 %v938, 0.25
          %v943 = vld [vmem:[%s724] sm:$0xff]
          %v944 = vadd.f32 %v943, %v942
          %945 = vst.msk [vmem:[%s724] sm:$0xff] %vm816, %v944
        $region100: #{tpu_custom_call.1} parent=71 // pred_fallthru
          _
        %v946 = vpack.c.bf16 %v938, %v938
        %947 = vrot.lane.b32.xlu0 %v813, 56
        %v948 = vpop.permute.xlu0 %947
        %v950 = vsel %vm816, %v946, 0
        %v953 = vsel %vm871, %v948, 0
        %955 = vmatpush.bf16.msra.mxu0 0
        %956 = vmatpush.bf16.msra.mxu0 0
        %957 = vmatpush.bf16.msra.mxu0 0
        %958 = vmatpush.bf16.msra.mxu0 0
        %959 = vmatpush.bf16.msra.mxu0 0
        %960 = vmatpush.bf16.msra.mxu0 0
        %961 = vmatpush.bf16.msra.mxu0 0
        %962 = vmatpush.bf16.msra.mxu0 %v953
        %963 = vmatmul.bf16.gmra.mxu0 %v950
        %v964 = vpop.f32.mrf.mxu0
        %v965 = vadd.f32 0.0, %v964
        %v966 = vpop.f32.mrf.mxu0
        %967 = vdwg.mxu0
        %969 = vrot.lane.b32.xlu0 %v965, 8
        %v970 = vpop.permute.xlu0 %969
        %vm972 = vcmask 130112
        %973 = vst.msk [vmem:[#allocation2] sm:$0xff] %vm972, %v970
        %974 = vrot.lane.b32.xlu0 %v891, 112
        %v975 = vpop.permute.xlu0 %974
        %976 = vrot.lane.b32.xlu0 %v813, 80
        %v977 = vpop.permute.xlu0 %976
        %v979 = vsel %vm816, %v975, 0
        %v982 = vsel %vm816, %v977, 0
        %984 = vmatpush.bf16.xpose.msra.mxu0 0
        %985 = vmatpush.bf16.xpose.msra.mxu0 0
        %986 = vmatpush.bf16.xpose.msra.mxu0 0
        %987 = vmatpush.bf16.xpose.msra.mxu0 0
        %988 = vmatpush.bf16.xpose.msra.mxu0 0
        %989 = vmatpush.bf16.xpose.msra.mxu0 0
        %990 = vmatpush.bf16.xpose.msra.mxu0 0
        %991 = vmatpush.bf16.xpose.msra.mxu0 %v982
        %992 = vmatmul.bf16.gmra.mxu0 %v979
        %v993 = vpop.f32.mrf.mxu0
        %v994 = vadd.f32 0.0, %v993
        %v995 = vpop.f32.mrf.mxu0
        %996 = vdwg.mxu0
        %v997 = vsel %vm816, %v994, -inf
        %998 = vmax.xlane.f32.xlu0 %v997
        %v999 = vpop.xlane.xlu0 %998
        %v1000 = vsub.f32 %v994, %v999
        %v1001 = vmul.f32 %v1000, 1.442695
        %v1002 = vpow.pop %v1001
        %v1003 = vsel %vm816, %v1002, 0.0
        %1004 = vadd.xlane.f32.xlu0 %v1003
        %v1005 = vpop.xlane.xlu0 %1004
        %v1006 = vrcp.pop %v1005
        %v1007 = vmul.f32 %v1005, %v1006
        %v1008 = vsub.f32 1.0, %v1007
        %v1009 = vmul.f32 %v1006, %v1008
        %v1010 = vadd.f32 %v1006, %v1009
        %vm1011 = vweird.f32 %v1005
        %vm1012 = vweird.f32 %v1006
        %vm1013 = vmor %vm1011, %vm1012
        %v1014 = vsel %vm1013, %v1006, %v1010
        %v1015 = vand.u32 2147483647, %v1005
        %vm1016 = vcmp.eq.f32.partialorder %v1015, 8.507059e+37
        %v1017 = vand.u32 %v1005, 2147483648
        %v1018 = vor.u32 1.1754944e-38, %v1017
        %v1019 = vsel %vm1016, %v1018, %v1014
        %v1020 = vmul.f32 %v1002, %v1019
        // Predicated region
        $region101: #{tpu_custom_call.1} parent=71 // pred_check
          %p1021 = pneg %p810
        $region102: #{tpu_custom_call.1} parent=71 // pred_check_branch
          %1023 = sbr.rel (%p1021) target = $region104
        $region103: #{tpu_custom_call.1} parent=71 // pred_region
          %v1024 = vmul.f32 %v1020, 0.25
          %v1025 = vld [vmem:[%s724] sm:$0xff]
          %v1026 = vadd.f32 %v1025, %v1024
          %1027 = vst.msk [vmem:[%s724] sm:$0xff] %vm816, %v1026
        $region104: #{tpu_custom_call.1} parent=71 // pred_fallthru
          _
        %v1028 = vpack.c.bf16 %v1020, %v1020
        %1029 = vrot.lane.b32.xlu0 %v813, 48
        %v1030 = vpop.permute.xlu0 %1029
        %v1032 = vsel %vm816, %v1028, 0
        %v1035 = vsel %vm871, %v1030, 0
        %1037 = vmatpush.bf16.msra.mxu0 0
        %1038 = vmatpush.bf16.msra.mxu0 0
        %1039 = vmatpush.bf16.msra.mxu0 0
        %1040 = vmatpush.bf16.msra.mxu0 0
        %1041 = vmatpush.bf16.msra.mxu0 0
        %1042 = vmatpush.bf16.msra.mxu0 0
        %1043 = vmatpush.bf16.msra.mxu0 0
        %1044 = vmatpush.bf16.msra.mxu0 %v1035
        %1045 = vmatmul.bf16.gmra.mxu0 %v1032
        %v1046 = vpop.f32.mrf.mxu0
        %v1047 = vadd.f32 0.0, %v1046
        %v1048 = vpop.f32.mrf.mxu0
        %1049 = vdwg.mxu0
        %1051 = vrot.lane.b32.xlu0 %v1047, 16
        %v1052 = vpop.permute.xlu0 %1051
        %vm1054 = vcmask 195712
        %1055 = vst.msk [vmem:[#allocation2] sm:$0xff] %vm1054, %v1052
        %1056 = vrot.lane.b32.xlu0 %v891, 104
        %v1057 = vpop.permute.xlu0 %1056
        %1058 = vrot.lane.b32.xlu0 %v813, 72
        %v1059 = vpop.permute.xlu0 %1058
        %v1061 = vsel %vm816, %v1057, 0
        %v1064 = vsel %vm816, %v1059, 0
        %1066 = vmatpush.bf16.xpose.msra.mxu0 0
        %1067 = vmatpush.bf16.xpose.msra.mxu0 0
        %1068 = vmatpush.bf16.xpose.msra.mxu0 0
        %1069 = vmatpush.bf16.xpose.msra.mxu0 0
        %1070 = vmatpush.bf16.xpose.msra.mxu0 0
        %1071 = vmatpush.bf16.xpose.msra.mxu0 0
        %1072 = vmatpush.bf16.xpose.msra.mxu0 0
        %1073 = vmatpush.bf16.xpose.msra.mxu0 %v1064
        %1074 = vmatmul.bf16.gmra.mxu0 %v1061
        %v1075 = vpop.f32.mrf.mxu0
        %v1076 = vadd.f32 0.0, %v1075
        %v1077 = vpop.f32.mrf.mxu0
        %1078 = vdwg.mxu0
        %v1079 = vsel %vm816, %v1076, -inf
        %1080 = vmax.xlane.f32.xlu0 %v1079
        %v1081 = vpop.xlane.xlu0 %1080
        %v1082 = vsub.f32 %v1076, %v1081
        %v1083 = vmul.f32 %v1082, 1.442695
        %v1084 = vpow.pop %v1083
        %v1085 = vsel %vm816, %v1084, 0.0
        %1086 = vadd.xlane.f32.xlu0 %v1085
        %v1087 = vpop.xlane.xlu0 %1086
        %v1088 = vrcp.pop %v1087
        %v1089 = vmul.f32 %v1087, %v1088
        %v1090 = vsub.f32 1.0, %v1089
        %v1091 = vmul.f32 %v1088, %v1090
        %v1092 = vadd.f32 %v1088, %v1091
        %vm1093 = vweird.f32 %v1087
        %vm1094 = vweird.f32 %v1088
        %vm1095 = vmor %vm1093, %vm1094
        %v1096 = vsel %vm1095, %v1088, %v1092
        %v1097 = vand.u32 2147483647, %v1087
        %vm1098 = vcmp.eq.f32.partialorder %v1097, 8.507059e+37
        %v1099 = vand.u32 %v1087, 2147483648
        %v1100 = vor.u32 1.1754944e-38, %v1099
        %v1101 = vsel %vm1098, %v1100, %v1096
        %v1102 = vmul.f32 %v1084, %v1101
        // Predicated region
        $region105: #{tpu_custom_call.1} parent=71 // pred_check
          %p1103 = pneg %p810
        $region106: #{tpu_custom_call.1} parent=71 // pred_check_branch
          %1105 = sbr.rel (%p1103) target = $region108
        $region107: #{tpu_custom_call.1} parent=71 // pred_region
          %v1106 = vmul.f32 %v1102, 0.25
          %v1107 = vld [vmem:[%s724] sm:$0xff]
          %v1108 = vadd.f32 %v1107, %v1106
          %1109 = vst.msk [vmem:[%s724] sm:$0xff] %vm816, %v1108
        $region108: #{tpu_custom_call.1} parent=71 // pred_fallthru
          _
        %v1110 = vpack.c.bf16 %v1102, %v1102
        %1111 = vrot.lane.b32.xlu0 %v813, 40
        %v1112 = vpop.permute.xlu0 %1111
        %v1114 = vsel %vm816, %v1110, 0
        %v1117 = vsel %vm871, %v1112, 0
        %1119 = vmatpush.bf16.msra.mxu0 0
        %1120 = vmatpush.bf16.msra.mxu0 0
        %1121 = vmatpush.bf16.msra.mxu0 0
        %1122 = vmatpush.bf16.msra.mxu0 0
        %1123 = vmatpush.bf16.msra.mxu0 0
        %1124 = vmatpush.bf16.msra.mxu0 0
        %1125 = vmatpush.bf16.msra.mxu0 0
        %1126 = vmatpush.bf16.msra.mxu0 %v1117
        %1127 = vmatmul.bf16.gmra.mxu0 %v1114
        %v1128 = vpop.f32.mrf.mxu0
        %v1129 = vadd.f32 0.0, %v1128
        %v1130 = vpop.f32.mrf.mxu0
        %1131 = vdwg.mxu0
        %1133 = vrot.lane.b32.xlu0 %v1129, 24
        %v1134 = vpop.permute.xlu0 %1133
        %vm1136 = vcmask 261312
        %1137 = vst.msk [vmem:[#allocation2] sm:$0xff] %vm1136, %v1134
        %v1138 = vld [vmem:[#allocation2] sm:$0xff]
        %v1139 = vpack.c.bf16 %v1138, %v1138
        %v1140 = vld [vmem:[%s737] sm:$0xf]
        %v1141 = vld [vmem:[%s737 + $0x4] sm:$0xf]
        %v1142 = vld [vmem:[%s737 + $0x8] sm:$0xf]
        %v1143 = vld [vmem:[%s737 + $0xc] sm:$0xf]
        %v1144 = vld [vmem:[%s740] sm:$0x1]
        %v1146 = vperm.slane %v1144, 0
        %v1152 = vunpack.c.l.b16 %v1140
        %v1153 = vunpack.c.l.b16 %v1141
        %v1154 = vunpack.c.l.b16 %v1142
        %v1155 = vunpack.c.l.b16 %v1143
        %v1156 = vpack.c.b16 %v1153, %v1152
        %v1157 = vpack.c.b16 %v1155, %v1154
        %v1161 = vsel %vm790, %v1139, 0
        %1163 = vmatpush.bf16.msra.mxu0 0
        %1164 = vmatpush.bf16.msra.mxu0 0
        %1165 = vmatpush.bf16.msra.mxu0 0
        %1166 = vmatpush.bf16.msra.mxu0 0
        %1167 = vmatpush.bf16.msra.mxu0 0
        %1168 = vmatpush.bf16.msra.mxu0 0
        %1169 = vmatpush.bf16.msra.mxu0 %v1157
        %1170 = vmatpush.bf16.msra.mxu0 %v1156
        %1171 = vmatmul.bf16.gmra.mxu0 %v1161
        %v1172 = vpop.f32.mrf.mxu0
        %v1173 = vadd.f32 %v1146, %v1172
        %v1174 = vpop.f32.mrf.mxu0
        %1175 = vdwg.mxu0
        %v1176 = vadd.f32 %v768, %v1173
        %v1177 = vsel %vm790, %v1176, 0.0
        %1178 = vadd.xlane.f32.xlu0 %v1177
        %v1179 = vpop.xlane.xlu0 %1178
        %v1180 = vrcp.pop 32.0
        %v1181 = vmul.f32 32.0, %v1180
        %v1182 = vsub.f32 1.0, %v1181
        %v1183 = vmul.f32 %v1180, %v1182
        %v1184 = vadd.f32 %v1180, %v1183
        %vm1185 = vweird.f32 %v1180
        %v1186 = vsel %vm1185, %v1180, %v1184
        %v1187 = vmul.f32 %v1179, %v1186
        %v1188 = vsub.f32 %v1176, %v1187
        %v1189 = vmul.f32 %v1188, %v1188
        %v1190 = vsel %vm790, %v1189, 0.0
        %1191 = vadd.xlane.f32.xlu0 %v1190
        %v1192 = vpop.xlane.xlu0 %1191
        %v1193 = vmul.f32 %v1192, %v1186
        %v1194 = vadd.f32 %v1193, 1e-05
        %v1195 = vrsqrt.pop %v1194
        %v1196 = vmul.f32 %v1195, %v1194
        %v1197 = vmul.f32 %v1196, %v1195
        %v1198 = vmul.f32 0.5, %v1197
        %v1199 = vsub.f32 1.5, %v1198
        %v1200 = vmul.f32 %v1195, %v1199
        %vm1201 = vweird.f32 %v1194
        %vm1202 = vweird.f32 %v1195
        %vm1203 = vmor %vm1201, %vm1202
        %v1204 = vsel %vm1203, %v1195, %v1200
        %v1205 = vmul.f32 %v1188, %v1204
        %v1206 = vld [vmem:[%s743] sm:$0x1]
        %v1208 = vperm.slane %v1206, 0
        %v1210 = vmul.f32 %v1205, %v1208
        %v1211 = vld [vmem:[%s746] sm:$0x1]
        %v1213 = vperm.slane %v1211, 0
        %v1215 = vadd.f32 %v1210, %v1213
        %v1216 = vpack.c.bf16 %v1215, %v1215
        %v1217 = vld [vmem:[%s751] sm:$0xf]
        %v1218 = vld [vmem:[%s751 + $0x4] sm:$0xf]
        %v1219 = vld [vmem:[%s751 + $0x8] sm:$0xf]
        %v1220 = vld [vmem:[%s751 + $0xc] sm:$0xf]
        %v1221 = vld [vmem:[%s609] sm:$0x1]
        %v1223 = vperm.slane %v1221, 0
        %v1229 = vunpack.c.l.b16 %v1217
        %v1230 = vunpack.c.l.b16 %v1218
        %v1231 = vunpack.c.l.b16 %v1219
        %v1232 = vunpack.c.l.b16 %v1220
        %v1233 = vpack.c.b16 %v1230, %v1229
        %v1234 = vpack.c.b16 %v1232, %v1231
        %v1238 = vsel %vm790, %v1216, 0
        %1240 = vmatpush.bf16.msra.mxu0 0
        %1241 = vmatpush.bf16.msra.mxu0 0
        %1242 = vmatpush.bf16.msra.mxu0 0
        %1243 = vmatpush.bf16.msra.mxu0 0
        %1244 = vmatpush.bf16.msra.mxu0 0
        %1245 = vmatpush.bf16.msra.mxu0 0
        %1246 = vmatpush.bf16.msra.mxu0 %v1234
        %1247 = vmatpush.bf16.msra.mxu0 %v1233
        %1248 = vmatmul.bf16.gmra.mxu0 %v1238
        %v1249 = vpop.f32.mrf.mxu0
        %v1250 = vadd.f32 %v1223, %v1249
        %v1251 = vpop.f32.mrf.mxu0
        %1252 = vdwg.mxu0
        %v1253 = vmax.f32 %v1250, 0.0
        %v1254 = vpack.c.bf16 %v1253, %v1253
        %v1255 = vld [vmem:[%s756] sm:$0xf]
        %v1256 = vld [vmem:[%s756 + $0x4] sm:$0xf]
        %v1257 = vld [vmem:[%s756 + $0x8] sm:$0xf]
        %v1258 = vld [vmem:[%s756 + $0xc] sm:$0xf]
        %v1259 = vld [vmem:[%s756 + $0x10] sm:$0xf]
        %v1260 = vld [vmem:[%s756 + $0x14] sm:$0xf]
        %v1261 = vld [vmem:[%s756 + $0x18] sm:$0xf]
        %v1262 = vld [vmem:[%s756 + $0x1c] sm:$0xf]
        %v1263 = vld [vmem:[%s618] sm:$0x1]
        %v1265 = vperm.slane %v1263, 0
        %v1275 = vunpack.c.l.b16 %v1255
        %v1276 = vunpack.c.l.b16 %v1256
        %v1277 = vunpack.c.l.b16 %v1257
        %v1278 = vunpack.c.l.b16 %v1258
        %v1279 = vunpack.c.l.b16 %v1259
        %v1280 = vunpack.c.l.b16 %v1260
        %v1281 = vunpack.c.l.b16 %v1261
        %v1282 = vunpack.c.l.b16 %v1262
        %v1283 = vpack.c.b16 %v1276, %v1275
        %v1284 = vpack.c.b16 %v1278, %v1277
        %v1285 = vpack.c.b16 %v1280, %v1279
        %v1286 = vpack.c.b16 %v1282, %v1281
        %vm1291 = vcmask 523264
        %v1293 = vsel %vm1291, %v1254, 0
        %1295 = vmatpush.bf16.msra.mxu0 0
        %1296 = vmatpush.bf16.msra.mxu0 0
        %1297 = vmatpush.bf16.msra.mxu0 0
        %1298 = vmatpush.bf16.msra.mxu0 0
        %1299 = vmatpush.bf16.msra.mxu0 %v1286
        %1300 = vmatpush.bf16.msra.mxu0 %v1285
        %1301 = vmatpush.bf16.msra.mxu0 %v1284
        %1302 = vmatpush.bf16.msra.mxu0 %v1283
        %1303 = vmatmul.bf16.gmra.mxu0 %v1293
        %v1304 = vpop.f32.mrf.mxu0
        %v1305 = vadd.f32 %v1265, %v1304
        %v1306 = vpop.f32.mrf.mxu0
        %1307 = vdwg.mxu0
        %v1308 = vadd.f32 %v1215, %v1305
        %v1309 = vsel %vm790, %v1308, 0.0
        %1310 = vadd.xlane.f32.xlu0 %v1309
        %v1311 = vpop.xlane.xlu0 %1310
        %v1312 = vmul.f32 %v1311, %v1186
        %v1313 = vsub.f32 %v1308, %v1312
        %v1314 = vmul.f32 %v1313, %v1313
        %v1315 = vsel %vm790, %v1314, 0.0
        %1316 = vadd.xlane.f32.xlu0 %v1315
        %v1317 = vpop.xlane.xlu0 %1316
        %v1318 = vmul.f32 %v1317, %v1186
        %v1319 = vadd.f32 %v1318, 1e-05
        %v1320 = vrsqrt.pop %v1319
        %v1321 = vmul.f32 %v1320, %v1319
        %v1322 = vmul.f32 %v1321, %v1320
        %v1323 = vmul.f32 0.5, %v1322
        %v1324 = vsub.f32 1.5, %v1323
        %v1325 = vmul.f32 %v1320, %v1324
        %vm1326 = vweird.f32 %v1319
        %vm1327 = vweird.f32 %v1320
        %vm1328 = vmor %vm1326, %vm1327
        %v1329 = vsel %vm1328, %v1320, %v1325
        %v1330 = vmul.f32 %v1313, %v1329
        %v1331 = vld [vmem:[%s627] sm:$0x1]
        %v1333 = vperm.slane %v1331, 0
        %v1335 = vmul.f32 %v1330, %v1333
        %v1336 = vld [vmem:[%s759] sm:$0x1]
        %v1338 = vperm.slane %v1336, 0
        %v1340 = vadd.f32 %v1335, %v1338
        %1341 = vst.msk [vmem:[%s717] sm:$0xff] %vm790, %v1340
        %s1342 = sand.u32 %s399, 1
        %s1343 = scalar_lea.sflag [#allocation5], %s1342
        %s1344 = sand.u32 %s399, 1
        %s1345 = smul.addr %s1344, 8
        %s1346 = scalar_lea.vmem [#allocation11], %s1345
        %s1347 = sand.u32 %s425, 1
        %s1348 = scalar_lea.sflag [#allocation13], %s1347
        %s1349 = sand.u32 %s425, 1
        %s1350 = smul.addr %s1349, 8
        %s1351 = scalar_lea.vmem [#allocation12], %s1350
        // Predicated region
        $region109: #{tpu_custom_call.1} parent=71 // pred_check
          %p1352 = pneg %p409
        $region110: #{tpu_custom_call.1} parent=71 // pred_check_branch
          %1354 = sbr.rel (%p1352) target = $region112
        $region111: #{tpu_custom_call.1} parent=71 // pred_region
          %1356 = vsyncadd %s1343, 0
          %s1357 = smul.addr %s45, 8
          %s1358 = scalar_lea.hbm %s13, %s1357
          %s1360 = sshll.u32 %s1346, 4
          %s1361 = int_to_ptr.vmem [resolvable:$true] %s1360
          %s1362 = sshll.u32 %s1358, 4
          %s1363 = int_to_ptr.hbm [resolvable:$true] %s1362
          %1365 = dma.vmem_to_hbm [thread:$0]  %s1361, 128, %s1363, %s1343
        $region112: #{tpu_custom_call.1} parent=71 // pred_fallthru
          _
        // Predicated region
        $region113: #{tpu_custom_call.1} parent=71 // pred_check
          %p1366 = pneg %p435
        $region114: #{tpu_custom_call.1} parent=71 // pred_check_branch
          %1368 = sbr.rel (%p1366) target = $region116
        $region115: #{tpu_custom_call.1} parent=71 // pred_region
          %1370 = vsyncadd %s1348, 0
          %s1371 = smul.addr %s45, 8
          %s1372 = scalar_lea.hbm %s14, %s1371
          %s1374 = sshll.u32 %s1351, 4
          %s1375 = int_to_ptr.vmem [resolvable:$true] %s1374
          %s1376 = sshll.u32 %s1372, 4
          %s1377 = int_to_ptr.hbm [resolvable:$true] %s1376
          %1379 = dma.vmem_to_hbm [thread:$0]  %s1375, 128, %s1377, %s1348
        $region116: #{tpu_custom_call.1} parent=71 // pred_fallthru
          _
      $region72: #{tpu_custom_call.1} parent=5 // pred_fallthru
        _
      %p1380 = scmp.le.s32.totalorder 2, %s36
      // Predicated region
      $region117: #{tpu_custom_call.1} parent=5 // pred_check
        %p1381 = pneg %p1380
      $region118: #{tpu_custom_call.1} parent=5 // pred_check_branch
        %1383 = sbr.rel (%p1381) target = $region120
      $region119: #{tpu_custom_call.1} parent=5 // pred_region
        %s1384 = ssub.s32 %s36, 2
        // Predicated region
        $region121: #{tpu_custom_call.1} parent=119 // pred_check
          %p1385 = pneg %p415
        $region122: #{tpu_custom_call.1} parent=119 // pred_check_branch
          %1387 = sbr.rel (%p1385) target = $region124
        $region123: #{tpu_custom_call.1} parent=119 // pred_region
          %s1388 = sand.u32 %s400, 1
          %s1389 = scalar_lea.sflag [#allocation5], %s1388
          %s1390 = sand.u32 %s400, 1
          %s1391 = smul.addr %s1390, 8
          %s1392 = scalar_lea.vmem [#allocation11], %s1391
          %1394 = dma.done %s1389, 128
        $region124: #{tpu_custom_call.1} parent=119 // pred_fallthru
          _
        // Predicated region
        $region125: #{tpu_custom_call.1} parent=119 // pred_check
          %p1395 = pneg %p441
        $region126: #{tpu_custom_call.1} parent=119 // pred_check_branch
          %1397 = sbr.rel (%p1395) target = $region128
        $region127: #{tpu_custom_call.1} parent=119 // pred_region
          %s1398 = sand.u32 %s426, 1
          %s1399 = scalar_lea.sflag [#allocation13], %s1398
          %s1400 = sand.u32 %s426, 1
          %s1401 = smul.addr %s1400, 8
          %s1402 = scalar_lea.vmem [#allocation12], %s1401
          %1404 = dma.done %s1399, 128
        $region128: #{tpu_custom_call.1} parent=119 // pred_fallthru
          _
      $region120: #{tpu_custom_call.1} parent=5 // pred_fallthru
        _
    $region6: #{tpu_custom_call.1} parent=1 // loop_footer
      %s40 = sadd.s32 1, %s36
    $region7: #{tpu_custom_call.1} parent=1 // loop_footer_branch
      %35 = sbr.rel target = $region3
    $region8: #{tpu_custom_call.1} parent=1 // loop_exit
      _
    %1405 = vsyncpa [#allocation4], 1
    %s1406 = scalar_lea.sflag [#allocation4], 1
    %1407 = vsyncpa %s1406, 1
    %1408 = vsyncpa [#allocation7], 1
    %s1409 = scalar_lea.sflag [#allocation7], 1
    %1410 = vsyncpa %s1409, 1
    %1411 = vsyncpa [#allocation10], 1
    %s1412 = scalar_lea.sflag [#allocation10], 1
    %1413 = vsyncpa %s1412, 1
    %1414 = vsyncpa [#allocation5], 1
    %s1415 = scalar_lea.sflag [#allocation5], 1
    %1416 = vsyncpa %s1415, 1
    %1417 = vsyncpa [#allocation13], 1
    %s1418 = scalar_lea.sflag [#allocation13], 1
    %1419 = vsyncpa %s1418, 1

</llo_original>
